<compile_context>
chip_gen: v7x
topology: tpu7x:2x2x1
jax: 0.10.0
libtpu: 0.0.40
codegen_flags: <defaults>
</compile_context>

<pallas_src>
import functools

import jax
import jax.numpy as jnp
from jax import lax
from jax.experimental import pallas as pl
from jax.experimental.pallas import tpu as pltpu

_EPS = 1e-5
# Safe scoped-VMEM budget across v5e (16 MiB default) / v6e (32) / v7x (32 of 64 phys).
_VMEM_LIMIT = 32 * 1024 * 1024


# --------------------------------------------------------------------------
# Small helpers (tile sizing / padding)
# --------------------------------------------------------------------------

def _round_up(x, m):
    return ((x + m - 1) // m) * m


def _row_tile(n, d, itemsize, preferred, budget_bytes=2 * 1024 * 1024):
    """Row tile: multiple of 8 sublanes, <= preferred, <= ~budget per buffer."""
    per_row = max(1, d * itemsize)
    cap = max(8, (budget_bytes // per_row) // 8 * 8)
    t = min(preferred, cap, _round_up(n, 8))
    return max(8, _round_up(t, 8))


def _col_tile(d):
    """Column tile: lane-dense multiple of 128 dividing d, else the full dim."""
    if d % 128 == 0:
        for td in (512, 384, 256, 128):
            if d % td == 0:
                return td
    return d


def _pad_rows(x, n_pad):
    n = x.shape[0]
    if n_pad == n:
        return x
    return jnp.pad(x, ((0, n_pad - n), (0, 0)))


# --------------------------------------------------------------------------
# LayerNorm: row-wise, tiled over N, fully parallel grid.
# --------------------------------------------------------------------------

def _layernorm_kernel(x_ref, gamma_ref, beta_ref, o_ref, *, eps):
    x = x_ref[...].astype(jnp.float32)                       # [TM, D]
    mean = jnp.mean(x, axis=-1, keepdims=True)
    var = jnp.mean((x - mean) ** 2, axis=-1, keepdims=True)
    xhat = (x - mean) * lax.rsqrt(var + eps)
    o_ref[...] = (xhat * gamma_ref[...] + beta_ref[...]).astype(o_ref.dtype)


def layernorm(x, gamma, beta, *, eps=_EPS, preferred_rows=1024):
    n, d = x.shape
    tm = _row_tile(n, d, x.dtype.itemsize, preferred_rows)
    n_pad = _round_up(n, tm)
    xp = _pad_rows(x, n_pad)
    out = pl.pallas_call(
        functools.partial(_layernorm_kernel, eps=eps),
        out_shape=jax.ShapeDtypeStruct((n_pad, d), x.dtype),
        grid_spec=pltpu.PrefetchScalarGridSpec(
            num_scalar_prefetch=0,
            grid=(n_pad // tm,),
            in_specs=[pl.BlockSpec((tm, d), lambda i: (i, 0)),
                      pl.BlockSpec((1, d), lambda i: (0, 0)),
                      pl.BlockSpec((1, d), lambda i: (0, 0))],
            out_specs=pl.BlockSpec((tm, d), lambda i: (i, 0))),
        compiler_params=pltpu.CompilerParams(
            dimension_semantics=("parallel",),
            vmem_limit_bytes=_VMEM_LIMIT),
    )(xp, gamma, beta)
    return out[:n] if n_pad != n else out


# --------------------------------------------------------------------------
# BatchNorm1d (training mode): per-feature stats are independent per column,
# so tile over the feature axis D — single pass, exact stats, parallel grid.
# TODO(synk): for extremely large N a column slab may not fit VMEM; a two-pass
# N-tiled variant with sum/sumsq accumulators would be needed then.
# --------------------------------------------------------------------------

def _batchnorm_kernel(x_ref, gamma_ref, beta_ref, o_ref, *, eps):
    x = x_ref[...].astype(jnp.float32)                       # [N, TD]
    mean = jnp.mean(x, axis=0, keepdims=True)
    var = jnp.mean((x - mean) ** 2, axis=0, keepdims=True)   # biased, like torch
    xhat = (x - mean) * lax.rsqrt(var + eps)
    o_ref[...] = (xhat * gamma_ref[...] + beta_ref[...]).astype(o_ref.dtype)


def batchnorm(x, gamma, beta, *, eps=_EPS):
    n, d = x.shape
    td = _col_tile(d)
    return pl.pallas_call(
        functools.partial(_batchnorm_kernel, eps=eps),
        out_shape=jax.ShapeDtypeStruct((n, d), x.dtype),
        grid_spec=pltpu.PrefetchScalarGridSpec(
            num_scalar_prefetch=0,
            grid=(d // td,),
            in_specs=[pl.BlockSpec((n, td), lambda j: (0, j)),
                      pl.BlockSpec((1, td), lambda j: (0, j)),
                      pl.BlockSpec((1, td), lambda j: (0, j))],
            out_specs=pl.BlockSpec((n, td), lambda j: (0, j))),
        compiler_params=pltpu.CompilerParams(
            dimension_semantics=("parallel",),
            vmem_limit_bytes=_VMEM_LIMIT),
    )(x, gamma, beta)


# --------------------------------------------------------------------------
# ContraNorm, folded into two pipelined phases over row tiles.
#
# Phase 1 ("prepare"):
#   gram    += X_tile^T @ X_tile        (f32 VMEM scratch)
#   colsum  += sum_rows(X_tile)         (f32 VMEM scratch)
#   at the last row tile (once):
#     W     = softmax(gram / temp, axis=1)
#     A     = multiplier*I - scale*W
#     mean  = (colsum / N) @ A                       # batch mean of y = X@A
#     E[y²] = diag(Aᵀ gram A) / N                    # exact, padded rows are 0
#     var   = max(E[y²] - mean², 0)  (biased, like torch)
#     B     = A * (gamma * rsqrt(var + eps))         # fold BN scale into A
#     shift = beta - mean * gamma * rsqrt(var + eps)
#
# Phase 2 ("apply"): out_tile = X_tile @ B + shift   (fully parallel grid)
#
# Zero-padded rows contribute nothing to gram or colsum, so padding N to a
# tile multiple is exact (all statistics divide by the true N).
# --------------------------------------------------------------------------

def _cn_prepare_kernel(x_ref, gamma_ref, beta_ref, b_ref, shift_ref,
                       gram_acc, colsum_acc, *,
                       inv_temp, multiplier, scale, eps, inv_n):
    @pl.when(pl.program_id(0) == 0)
    def _():
        gram_acc[...] = jnp.zeros_like(gram_acc)
        colsum_acc[...] = jnp.zeros_like(colsum_acc)

    x = x_ref[...]                                           # native dtype -> MXU
    gram_acc[...] += lax.dot_general(
        x, x, (((0,), (0,)), ((), ())), preferred_element_type=jnp.float32)
    colsum_acc[...] += jnp.sum(x.astype(jnp.float32), axis=0, keepdims=True)

    @pl.when(pl.program_id(0) == pl.num_programs(0) - 1)
    def _():
        d = gram_acc.shape[0]
        g = gram_acc[...]                                    # [D, D] f32
        # W = softmax(G / temp, axis=1); fold 1/temp into one multiply.
        s = g * inv_temp
        s = s - jnp.max(s, axis=1, keepdims=True)
        e = jnp.exp(s)
        w = e * pl.reciprocal(jnp.sum(e, axis=1, keepdims=True), approx=True)
        # A = multiplier*I - scale*W  (so that y = X @ A)
        row = lax.broadcasted_iota(jnp.int32, (d, d), 0)
        col = lax.broadcasted_iota(jnp.int32, (d, d), 1)
        eye = (row == col).astype(jnp.float32)
        a = multiplier * eye - scale * w
        # Batch stats of y derived analytically from G and colsum(X).
        mean_y = jnp.dot(colsum_acc[...] * inv_n, a,
                         preferred_element_type=jnp.float32)   # [1, D]
        ga = jnp.dot(g, a, preferred_element_type=jnp.float32)  # [D, D]
        ey2 = jnp.sum(a * ga, axis=0, keepdims=True) * inv_n    # diag(Aᵀ G A)/N
        var = jnp.maximum(ey2 - mean_y * mean_y, 0.0)
        rstd = lax.rsqrt(var + eps)
        scale_vec = gamma_ref[...] * rstd                        # [1, D]
        shift_ref[...] = beta_ref[...] - mean_y * scale_vec
        b_ref[...] = (a * scale_vec).astype(b_ref.dtype)


def _cn_apply_kernel(x_ref, b_ref, shift_ref, o_ref):
    y = jnp.dot(x_ref[...], b_ref[...], preferred_element_type=jnp.float32)
    o_ref[...] = (y + shift_ref[...]).astype(o_ref.dtype)


def contranorm(x, gamma, beta, *, scale, temp, use_scale, eps=_EPS,
               preferred_rows=512):
    n, d = x.shape
    multiplier = 1.0 + float(int(use_scale)) * float(scale)
    tm = _row_tile(n, d, x.dtype.itemsize, preferred_rows)
    n_pad = _round_up(n, tm)
    n_tiles = n_pad // tm
    xp = _pad_rows(x, n_pad)
    itemsize = x.dtype.itemsize

    # Phase 1: gram + colsum accumulation -> folded affine map (B, shift).
    b_mat, shift = pl.pallas_call(
        functools.partial(_cn_prepare_kernel, inv_temp=1.0 / float(temp),
                          multiplier=multiplier, scale=float(scale),
                          eps=eps, inv_n=1.0 / float(n)),
        out_shape=(jax.ShapeDtypeStruct((d, d), x.dtype),
                   jax.ShapeDtypeStruct((1, d), jnp.float32)),
        grid_spec=pltpu.PrefetchScalarGridSpec(
            num_scalar_prefetch=0,
            grid=(n_tiles,),
            in_specs=[pl.BlockSpec((tm, d), lambda i: (i, 0)),
                      pl.BlockSpec((1, d), lambda i: (0, 0)),
                      pl.BlockSpec((1, d), lambda i: (0, 0))],
            out_specs=[pl.BlockSpec((d, d), lambda i: (0, 0)),
                       pl.BlockSpec((1, d), lambda i: (0, 0))],
            scratch_shapes=[pltpu.VMEM((d, d), jnp.float32),
                            pltpu.VMEM((1, d), jnp.float32)]),
        compiler_params=pltpu.CompilerParams(
            dimension_semantics=("arbitrary",),
            vmem_limit_bytes=_VMEM_LIMIT),
        cost_estimate=pl.CostEstimate(
            flops=2 * n_pad * d * d + 2 * d * d * d,
            transcendentals=d * d,
            bytes_accessed=(n_pad * d + d * d) * itemsize),
    )(xp, gamma, beta)

    # Phase 2: out = X @ B + shift, one fully parallel pass over row tiles.
    out = pl.pallas_call(
        _cn_apply_kernel,
        out_shape=jax.ShapeDtypeStruct((n_pad, d), x.dtype),
        grid_spec=pltpu.PrefetchScalarGridSpec(
            num_scalar_prefetch=0,
            grid=(n_tiles,),
            in_specs=[pl.BlockSpec((tm, d), lambda i: (i, 0)),
                      pl.BlockSpec((d, d), lambda i: (0, 0)),  # B stays resident
                      pl.BlockSpec((1, d), lambda i: (0, 0))],
            out_specs=pl.BlockSpec((tm, d), lambda i: (i, 0))),
        compiler_params=pltpu.CompilerParams(
            dimension_semantics=("parallel",),
            vmem_limit_bytes=_VMEM_LIMIT),
        cost_estimate=pl.CostEstimate(
            flops=2 * n_pad * d * d,
            transcendentals=0,
            bytes_accessed=(2 * n_pad * d + d * d) * itemsize),
    )(xp, b_mat, shift)
    return out[:n] if n_pad != n else out


# --------------------------------------------------------------------------
# GetNorm wrapper (mirrors the PyTorch dispatcher, with_graph=False only).
# --------------------------------------------------------------------------

class GetNorm:
    def __init__(self, norm, with_graph, *args, **kwargs):
        if with_graph:
            # TODO(synk): graph norms (GraphNorm, GraphContraNorm, ...) require
            # dgl batched-graph segment reductions; no clean Pallas port here.
            raise NotImplementedError("with_graph norms not implemented")
        if norm not in ("cn", "bn", "ln", "none"):
            raise NotImplementedError(f"norm = {norm} not implemented")
        self.norm_type = norm

        if norm == "none":
            self._fn = lambda x: x
            return

        hidden_dim = int(args[0] if args else kwargs["hidden_dim"])
        # PyTorch affine defaults: weight = ones, bias = zeros.
        self.gamma = jnp.ones((1, hidden_dim), jnp.float32)
        self.beta = jnp.zeros((1, hidden_dim), jnp.float32)
        gamma, beta = self.gamma, self.beta

        if norm == "cn":
            scale = float(kwargs.get("scale", args[1] if len(args) > 1 else 0))
            temp = float(kwargs.get("temp", args[2] if len(args) > 2 else 1))
            use_scale = bool(kwargs.get("use_scale",
                                        args[3] if len(args) > 3 else False))
            fn = functools.partial(contranorm, scale=scale, temp=temp,
                                   use_scale=use_scale)
        elif norm == "bn":
            fn = batchnorm
        else:  # "ln"
            fn = layernorm

        self._fn = jax.jit(lambda x: fn(x, gamma, beta))

    def __call__(self, feats):
        return self._fn(feats)


# --------------------------------------------------------------------------
# Example / self-check
# --------------------------------------------------------------------------

if __name__ == "__main__":
    key = jax.random.PRNGKey(0)
    # Small but lane-dense shapes: 256 rows, hidden_dim = 128 (multiple of 128
    # keeps every vreg lane and MXU column busy).
    N, D = 256, 128
    feats = jax.random.normal(key, (N, D), dtype=jnp.float32)

    temp, scale, use_scale = 1.0, 0.5, True

    # --- ContraNorm ('cn') --------------------------------------------------
    norm_cn = GetNorm("cn", False, D, scale=scale, temp=temp, use_scale=use_scale)
    out_cn = jax.block_until_ready(norm_cn(feats))

    def ref_cn(x):
        w = jax.nn.softmax((x.T @ x) / temp, axis=1)
        mult = 1.0 + int(use_scale) * scale
        y = mult * x - scale * (x @ w)
        m = y.mean(0, keepdims=True)
        v = ((y - m) ** 2).mean(0, keepdims=True)
        return (y - m) / jnp.sqrt(v + _EPS)

    assert out_cn.shape == (N, D) and out_cn.dtype == feats.dtype
    assert jnp.allclose(out_cn, ref_cn(feats), atol=3e-2, rtol=3e-2), "cn mismatch"

    # --- BatchNorm1d ('bn') -------------------------------------------------
    out_bn = jax.block_until_ready(GetNorm("bn", False, D)(feats))
    m = feats.mean(0, keepdims=True)
    v = ((feats - m) ** 2).mean(0, keepdims=True)
    ref_bn = (feats - m) / jnp.sqrt(v + _EPS)
    assert jnp.allclose(out_bn, ref_bn, atol=1e-3, rtol=1e-3), "bn mismatch"

    # --- LayerNorm ('ln') ---------------------------------------------------
    out_ln = jax.block_until_ready(GetNorm("ln", False, D)(feats))
    m = feats.mean(-1, keepdims=True)
    v = ((feats - m) ** 2).mean(-1, keepdims=True)
    ref_ln = (feats - m) / jnp.sqrt(v + _EPS)
    assert jnp.allclose(out_ln, ref_ln, atol=1e-3, rtol=1e-3), "ln mismatch"

    # --- Identity ('none') --------------------------------------------------
    out_id = jax.block_until_ready(GetNorm("none", False)(feats))
    assert jnp.array_equal(out_id, feats)

    print("KERNEL_OK")
</pallas_src>

<mosaic_0001>
module attributes {stable_mosaic.version = 11 : i64} {
  func.func @_cn_apply_kernel(%arg0: i32, %arg1: memref<256x128xf32, #tpu.memory_space<vmem>>, %arg2: memref<128x128xf32, #tpu.memory_space<vmem>>, %arg3: memref<1x128xf32, #tpu.memory_space<vmem>>, %arg4: memref<256x128xf32, #tpu.memory_space<vmem>>) attributes {dimension_semantics = [#tpu.dimension_semantics<parallel>], iteration_bounds = array<i64: 1>, scalar_prefetch = 0 : i64, scratch_operands = 0 : i64, tpu.core_type = #tpu.core_type<tc>, window_params = [{transform_indices = @transform_0, window_bounds = array<i64: 256, 128>}, {pipeline_mode = #tpu.pipeline_mode<synchronous>, transform_indices = @transform_1, window_bounds = array<i64: 128, 128>}, {pipeline_mode = #tpu.pipeline_mode<synchronous>, transform_indices = @transform_2, window_bounds = array<i64: 1, 128>}, {transform_indices = @transform_3, window_bounds = array<i64: 256, 128>}]} {
    %c0 = arith.constant 0 : index
    %c0_0 = arith.constant 0 : index
    %0 = vector.load %arg1[%c0, %c0_0] : memref<256x128xf32, #tpu.memory_space<vmem>>, vector<256x128xf32>
    %c0_1 = arith.constant 0 : index
    %c0_2 = arith.constant 0 : index
    %1 = vector.load %arg2[%c0_1, %c0_2] : memref<128x128xf32, #tpu.memory_space<vmem>>, vector<128x128xf32>
    %cst = arith.constant dense<0.000000e+00> : vector<256x128xf32>
    %2 = tpu.matmul %0, %1, %cst {dimension_numbers = #tpu.dot_dimension_numbers<[1], [0], [0], [1], [0, 0, 1, 1], [], []>} : vector<256x128xf32>, vector<128x128xf32>, vector<256x128xf32> -> vector<256x128xf32>
    %c0_3 = arith.constant 0 : index
    %c0_4 = arith.constant 0 : index
    %3 = vector.load %arg3[%c0_3, %c0_4] : memref<1x128xf32, #tpu.memory_space<vmem>>, vector<1x128xf32>
    %4 = vector.broadcast %3 : vector<1x128xf32> to vector<256x128xf32>
    %5 = arith.addf %2, %4 : vector<256x128xf32>
    %c0_5 = arith.constant 0 : index
    %c0_6 = arith.constant 0 : index
    %6 = vector.load %arg4[%c0_5, %c0_6] : memref<256x128xf32, #tpu.memory_space<vmem>>, vector<256x128xf32>
    tpu.vector_store %arg4[%c0_5, %c0_6], %5 {strides = array<i32>} : memref<256x128xf32, #tpu.memory_space<vmem>>, vector<256x128xf32>,
    return
  }
  func.func @transform_0(%arg0: i32) -> (i32, i32) {
    %c0_i32 = arith.constant 0 : i32
    %c0_i32_0 = arith.constant 0 : i32
    return %arg0, %c0_i32 : i32, i32
  }
  func.func @transform_1(%arg0: i32) -> (i32, i32) {
    %c0_i32 = arith.constant 0 : i32
    %c0_i32_0 = arith.constant 0 : i32
    %c0_i32_1 = arith.constant 0 : i32
    return %c0_i32, %c0_i32_0 : i32, i32
  }
  func.func @transform_2(%arg0: i32) -> (i32, i32) {
    %c0_i32 = arith.constant 0 : i32
    %c0_i32_0 = arith.constant 0 : i32
    %c0_i32_1 = arith.constant 0 : i32
    return %c0_i32, %c0_i32_0 : i32, i32
  }
  func.func @transform_3(%arg0: i32) -> (i32, i32) {
    %c0_i32 = arith.constant 0 : i32
    %c0_i32_0 = arith.constant 0 : i32
    return %arg0, %c0_i32 : i32, i32
  }
}

module attributes {stable_mosaic.version = 11 : i64} {
  func.func @_cn_prepare_kernel(%arg0: i32, %arg1: memref<256x128xf32, #tpu.memory_space<vmem>>, %arg2: memref<1x128xf32, #tpu.memory_space<vmem>>, %arg3: memref<1x128xf32, #tpu.memory_space<vmem>>, %arg4: memref<128x128xf32, #tpu.memory_space<vmem>>, %arg5: memref<1x128xf32, #tpu.memory_space<vmem>>, %arg6: memref<128x128xf32, #tpu.memory_space<vmem>>, %arg7: memref<1x128xf32, #tpu.memory_space<vmem>>) attributes {dimension_semantics = [#tpu.dimension_semantics<arbitrary>], iteration_bounds = array<i64: 1>, scalar_prefetch = 0 : i64, scratch_operands = 2 : i64, tpu.core_type = #tpu.core_type<tc>, window_params = [{transform_indices = @transform_0, window_bounds = array<i64: 256, 128>}, {pipeline_mode = #tpu.pipeline_mode<synchronous>, transform_indices = @transform_1, window_bounds = array<i64: 1, 128>}, {pipeline_mode = #tpu.pipeline_mode<synchronous>, transform_indices = @transform_2, window_bounds = array<i64: 1, 128>}, {pipeline_mode = #tpu.pipeline_mode<synchronous>, transform_indices = @transform_3, window_bounds = array<i64: 128, 128>}, {pipeline_mode = #tpu.pipeline_mode<synchronous>, transform_indices = @transform_4, window_bounds = array<i64: 1, 128>}]} {
    %c0_i32 = arith.constant 0 : i32
    %0 = arith.cmpi eq, %arg0, %c0_i32 : i32
    %1 = arith.extui %0 : i1 to i32
    %c0_i32_0 = arith.constant 0 : i32
    %2 = arith.cmpi ne, %1, %c0_i32_0 : i32
    scf.if %2 {
      %cst_13 = arith.constant 0.000000e+00 : f32
      %16 = vector.broadcast %cst_13 : f32 to vector<128x128xf32>
      %c0_14 = arith.constant 0 : index
      %c0_15 = arith.constant 0 : index
      %17 = vector.load %arg6[%c0_14, %c0_15] : memref<128x128xf32, #tpu.memory_space<vmem>>, vector<128x128xf32>
      tpu.vector_store %arg6[%c0_14, %c0_15], %16 {strides = array<i32>} : memref<128x128xf32, #tpu.memory_space<vmem>>, vector<128x128xf32>,
      %cst_16 = arith.constant 0.000000e+00 : f32
      %18 = vector.broadcast %cst_16 : f32 to vector<1x128xf32>
      %c0_17 = arith.constant 0 : index
      %c0_18 = arith.constant 0 : index
      %19 = vector.load %arg7[%c0_17, %c0_18] : memref<1x128xf32, #tpu.memory_space<vmem>>, vector<1x128xf32>
      tpu.vector_store %arg7[%c0_17, %c0_18], %18 {strides = array<i32>} : memref<1x128xf32, #tpu.memory_space<vmem>>, vector<1x128xf32>,
    } else {
    }
    %c0 = arith.constant 0 : index
    %c0_1 = arith.constant 0 : index
    %3 = vector.load %arg1[%c0, %c0_1] : memref<256x128xf32, #tpu.memory_space<vmem>>, vector<256x128xf32>
    %c0_2 = arith.constant 0 : index
    %c0_3 = arith.constant 0 : index
    %4 = vector.load %arg6[%c0_2, %c0_3] : memref<128x128xf32, #tpu.memory_space<vmem>>, vector<128x128xf32>
    %cst = arith.constant dense<0.000000e+00> : vector<128x128xf32>
    %5 = tpu.matmul %3, %3, %cst {dimension_numbers = #tpu.dot_dimension_numbers<[0], [0], [1], [1], [0, 1, 1, 1], [], []>} : vector<256x128xf32>, vector<256x128xf32>, vector<128x128xf32> -> vector<128x128xf32>
    %6 = arith.addf %4, %5 : vector<128x128xf32>
    %c0_4 = arith.constant 0 : index
    %c0_5 = arith.constant 0 : index
    %7 = vector.load %arg6[%c0_4, %c0_5] : memref<128x128xf32, #tpu.memory_space<vmem>>, vector<128x128xf32>
    tpu.vector_store %arg6[%c0_4, %c0_5], %6 {strides = array<i32>} : memref<128x128xf32, #tpu.memory_space<vmem>>, vector<128x128xf32>,
    %c0_6 = arith.constant 0 : index
    %c0_7 = arith.constant 0 : index
    %8 = vector.load %arg7[%c0_6, %c0_7] : memref<1x128xf32, #tpu.memory_space<vmem>>, vector<1x128xf32>
    %cst_8 = arith.constant dense<0.000000e+00> : vector<128xf32>
    %9 = vector.multi_reduction <add>, %3, %cst_8 [0] : vector<256x128xf32> to vector<128xf32>
    %10 = vector.shape_cast %9 : vector<128xf32> to vector<1x128xf32>
    %11 = arith.addf %8, %10 : vector<1x128xf32>
    %c0_9 = arith.constant 0 : index
    %c0_10 = arith.constant 0 : index
    %12 = vector.load %arg7[%c0_9, %c0_10] : memref<1x128xf32, #tpu.memory_space<vmem>>, vector<1x128xf32>
    tpu.vector_store %arg7[%c0_9, %c0_10], %11 {strides = array<i32>} : memref<1x128xf32, #tpu.memory_space<vmem>>, vector<1x128xf32>,
    %c0_i32_11 = arith.constant 0 : i32
    %13 = arith.cmpi eq, %arg0, %c0_i32_11 : i32
    %14 = arith.extui %13 : i1 to i32
    %c0_i32_12 = arith.constant 0 : i32
    %15 = arith.cmpi ne, %14, %c0_i32_12 : i32
    scf.if %15 {
      %c0_13 = arith.constant 0 : index
      %c0_14 = arith.constant 0 : index
      %16 = vector.load %arg6[%c0_13, %c0_14] : memref<128x128xf32, #tpu.memory_space<vmem>>, vector<128x128xf32>
      %cst_15 = arith.constant 1.000000e+00 : f32
      %17 = vector.broadcast %cst_15 : f32 to vector<128x128xf32>
      %18 = arith.mulf %16, %17 : vector<128x128xf32>
      %cst_16 = arith.constant dense<0xFF800000> : vector<128xf32>
      %19 = vector.multi_reduction <maximumf>, %18, %cst_16 [1] : vector<128x128xf32> to vector<128xf32>
      %20 = vector.shape_cast %19 : vector<128xf32> to vector<128x1xf32>
      %21 = vector.broadcast %20 : vector<128x1xf32> to vector<128x128xf32>
      %22 = arith.subf %18, %21 : vector<128x128xf32>
      %23 = math.exp %22 : vector<128x128xf32>
      %cst_17 = arith.constant dense<0.000000e+00> : vector<128xf32>
      %24 = vector.multi_reduction <add>, %23, %cst_17 [1] : vector<128x128xf32> to vector<128xf32>
      %25 = vector.shape_cast %24 : vector<128xf32> to vector<128x1xf32>
      %26 = tpu.reciprocal %25 {approx = true} : vector<128x1xf32> -> vector<128x1xf32>
      %27 = vector.broadcast %26 : vector<128x1xf32> to vector<128x128xf32>
      %28 = arith.mulf %23, %27 : vector<128x128xf32>
      %29 = tpu.iota {dimensions = array<i32: 0>} : vector<128x128xi32>
      %30 = tpu.iota {dimensions = array<i32: 1>} : vector<128x128xi32>
      %31 = arith.cmpi eq, %29, %30 : vector<128x128xi32>
      %32 = arith.extui %31 : vector<128x128xi1> to vector<128x128xi32>
      %33 = arith.sitofp %32 : vector<128x128xi32> to vector<128x128xf32>
      %cst_18 = arith.constant 1.500000e+00 : f32
      %34 = vector.broadcast %cst_18 : f32 to vector<128x128xf32>
      %35 = arith.mulf %34, %33 : vector<128x128xf32>
      %cst_19 = arith.constant 5.000000e-01 : f32
      %36 = vector.broadcast %cst_19 : f32 to vector<128x128xf32>
      %37 = arith.mulf %36, %28 : vector<128x128xf32>
      %38 = arith.subf %35, %37 : vector<128x128xf32>
      %c0_20 = arith.constant 0 : index
      %c0_21 = arith.constant 0 : index
      %39 = vector.load %arg7[%c0_20, %c0_21] : memref<1x128xf32, #tpu.memory_space<vmem>>, vector<1x128xf32>
      %cst_22 = arith.constant 3.906250e-03 : f32
      %40 = vector.broadcast %cst_22 : f32 to vector<1x128xf32>
      %41 = arith.mulf %39, %40 : vector<1x128xf32>
      %cst_23 = arith.constant dense<0.000000e+00> : vector<1x128xf32>
      %42 = tpu.matmul %41, %38, %cst_23 {dimension_numbers = #tpu.dot_dimension_numbers<[1], [0], [0], [1], [0, 0, 1, 1], [], []>} : vector<1x128xf32>, vector<128x128xf32>, vector<1x128xf32> -> vector<1x128xf32>
      %cst_24 = arith.constant dense<0.000000e+00> : vector<128x128xf32>
      %43 = tpu.matmul %16, %38, %cst_24 {dimension_numbers = #tpu.dot_dimension_numbers<[1], [0], [0], [1], [0, 0, 1, 1], [], []>} : vector<128x128xf32>, vector<128x128xf32>, vector<128x128xf32> -> vector<128x128xf32>
      %44 = arith.mulf %38, %43 : vector<128x128xf32>
      %cst_25 = arith.constant dense<0.000000e+00> : vector<128xf32>
      %45 = vector.multi_reduction <add>, %44, %cst_25 [0] : vector<128x128xf32> to vector<128xf32>
      %46 = vector.shape_cast %45 : vector<128xf32> to vector<1x128xf32>
      %cst_26 = arith.constant 3.906250e-03 : f32
      %47 = vector.broadcast %cst_26 : f32 to vector<1x128xf32>
      %48 = arith.mulf %46, %47 : vector<1x128xf32>
      %49 = arith.mulf %42, %42 : vector<1x128xf32>
      %50 = arith.subf %48, %49 : vector<1x128xf32>
      %cst_27 = arith.constant 0.000000e+00 : f32
      %51 = vector.broadcast %cst_27 : f32 to vector<1x128xf32>
      %52 = arith.maximumf %50, %51 : vector<1x128xf32>
      %cst_28 = arith.constant 9.99999974E-6 : f32
      %53 = vector.broadcast %cst_28 : f32 to vector<1x128xf32>
      %54 = arith.addf %52, %53 : vector<1x128xf32>
      %55 = math.rsqrt %54 : vector<1x128xf32>
      %c0_29 = arith.constant 0 : index
      %c0_30 = arith.constant 0 : index
      %56 = vector.load %arg2[%c0_29, %c0_30] : memref<1x128xf32, #tpu.memory_space<vmem>>, vector<1x128xf32>
      %57 = arith.mulf %56, %55 : vector<1x128xf32>
      %c0_31 = arith.constant 0 : index
      %c0_32 = arith.constant 0 : index
      %58 = vector.load %arg3[%c0_31, %c0_32] : memref<1x128xf32, #tpu.memory_space<vmem>>, vector<1x128xf32>
      %59 = arith.mulf %42, %57 : vector<1x128xf32>
      %60 = arith.subf %58, %59 : vector<1x128xf32>
      %c0_33 = arith.constant 0 : index
      %c0_34 = arith.constant 0 : index
      %61 = vector.load %arg5[%c0_33, %c0_34] : memref<1x128xf32, #tpu.memory_space<vmem>>, vector<1x128xf32>
      tpu.vector_store %arg5[%c0_33, %c0_34], %60 {strides = array<i32>} : memref<1x128xf32, #tpu.memory_space<vmem>>, vector<1x128xf32>,
      %62 = vector.broadcast %57 : vector<1x128xf32> to vector<128x128xf32>
      %63 = arith.mulf %38, %62 : vector<128x128xf32>
      %c0_35 = arith.constant 0 : index
      %c0_36 = arith.constant 0 : index
      %64 = vector.load %arg4[%c0_35, %c0_36] : memref<128x128xf32, #tpu.memory_space<vmem>>, vector<128x128xf32>
      tpu.vector_store %arg4[%c0_35, %c0_36], %63 {strides = array<i32>} : memref<128x128xf32, #tpu.memory_space<vmem>>, vector<128x128xf32>,
    } else {
    }
    return
  }
  func.func @transform_0(%arg0: i32) -> (i32, i32) {
    %c0_i32 = arith.constant 0 : i32
    %c0_i32_0 = arith.constant 0 : i32
    return %arg0, %c0_i32 : i32, i32
  }
  func.func @transform_1(%arg0: i32) -> (i32, i32) {
    %c0_i32 = arith.constant 0 : i32
    %c0_i32_0 = arith.constant 0 : i32
    %c0_i32_1 = arith.constant 0 : i32
    return %c0_i32, %c0_i32_0 : i32, i32
  }
  func.func @transform_2(%arg0: i32) -> (i32, i32) {
    %c0_i32 = arith.constant 0 : i32
    %c0_i32_0 = arith.constant 0 : i32
    %c0_i32_1 = arith.constant 0 : i32
    return %c0_i32, %c0_i32_0 : i32, i32
  }
  func.func @transform_3(%arg0: i32) -> (i32, i32) {
    %c0_i32 = arith.constant 0 : i32
    %c0_i32_0 = arith.constant 0 : i32
    %c0_i32_1 = arith.constant 0 : i32
    return %c0_i32, %c0_i32_0 : i32, i32
  }
  func.func @transform_4(%arg0: i32) -> (i32, i32) {
    %c0_i32 = arith.constant 0 : i32
    %c0_i32_0 = arith.constant 0 : i32
    %c0_i32_1 = arith.constant 0 : i32
    return %c0_i32, %c0_i32_0 : i32, i32
  }
}

</mosaic_0001>

<llo_original>
// kernel: _lambda_.3
$region0: #{_lambda_.3}
  #allocation0 [shape = 'u32[]', space=smem, size = 0x4, offset = 0x4, fixed_abs, tag = 'smem constant byte address 0x4 - core index']
  #allocation1 [shape = 'u32[144,128]{1,0:T(1,128)}', space=vmem, size = 0x12000, scoped, tag = 'internal scratch']
  %s0 = inlined_call_operand.vmem [shape: f32[256,128], index: 0, kind: input, shape index: {}]
  %s1 = inlined_call_operand.vmem [shape: f32[128,128], index: 1, kind: input, shape index: {}]
  %s2 = inlined_call_operand.vmem [shape: f32[1,128], index: 2, kind: input, shape index: {}]
  %s3 = inlined_call_operand.hbm [shape: f32[256,128], index: 3, kind: output, shape index: {}]
  %s4 = sld [smem:[#allocation0]]
  $region22: #{_lambda_.3} parent=0
    _
  %s6 = ssub.s32 1, %s4
  %s7 = scalar_select 0, %s6, %s4
  $region1: #{_lambda_.3} parent=0
    #allocation2 [shape = 'u8[131072]{0}', space=vmem, size = 0x20000, scoped, tag = 'output window, operand 0, single buffered']
    #allocation3 [shape = 's32[1]{0}', space=sflag, size = 0x4, scoped, tag = 'scoped memory for _lambda_.3']
    %8 = vsyncpa [#allocation3], 0
    // Predicated region
    $region2: #{_lambda_.3} parent=1 // pred_check
      _
    $region3: #{_lambda_.3} parent=1 // pred_check_branch
      %10 = sbr.rel (0) target = $region5
    $region4: #{_lambda_.3} parent=1 // pred_region
      _
    $region5: #{_lambda_.3} parent=1 // pred_fallthru
      _
    // Predicated region
    $region6: #{_lambda_.3} parent=1 // pred_check
      _
    $region7: #{_lambda_.3} parent=1 // pred_check_branch
      %12 = sbr.rel (0) target = $region9
    $region8: #{_lambda_.3} parent=1 // pred_region
      _
    $region9: #{_lambda_.3} parent=1 // pred_fallthru
      _
    // Predicated region
    $region10: #{_lambda_.3} parent=1 // pred_check
      _
    $region11: #{_lambda_.3} parent=1 // pred_check_branch
      %14 = sbr.rel (0) target = $region13
    $region12: #{_lambda_.3} parent=1 // pred_region
      _
    $region13: #{_lambda_.3} parent=1 // pred_fallthru
      _
    %v15 = vld [vmem:[%s0] sm:$0xff]
    %v16 = vld [vmem:[%s0 + $0x8] sm:$0xff]
    %v17 = vld [vmem:[%s0 + $0x10] sm:$0xff]
    %v18 = vld [vmem:[%s0 + $0x18] sm:$0xff]
    %v19 = vld [vmem:[%s0 + $0x20] sm:$0xff]
    %v20 = vld [vmem:[%s0 + $0x28] sm:$0xff]
    %v21 = vld [vmem:[%s0 + $0x30] sm:$0xff]
    %v22 = vld [vmem:[%s0 + $0x38] sm:$0xff]
    %v23 = vld [vmem:[%s0 + $0x40] sm:$0xff]
    %v24 = vld [vmem:[%s0 + $0x48] sm:$0xff]
    %v25 = vld [vmem:[%s0 + $0x50] sm:$0xff]
    %v26 = vld [vmem:[%s0 + $0x58] sm:$0xff]
    %v27 = vld [vmem:[%s0 + $0x60] sm:$0xff]
    %v28 = vld [vmem:[%s0 + $0x68] sm:$0xff]
    %v29 = vld [vmem:[%s0 + $0x70] sm:$0xff]
    %v30 = vld [vmem:[%s0 + $0x78] sm:$0xff]
    %v31 = vld [vmem:[%s0 + $0x80] sm:$0xff]
    %v32 = vld [vmem:[%s0 + $0x88] sm:$0xff]
    %v33 = vld [vmem:[%s0 + $0x90] sm:$0xff]
    %v34 = vld [vmem:[%s0 + $0x98] sm:$0xff]
    %v35 = vld [vmem:[%s0 + $0xa0] sm:$0xff]
    %v36 = vld [vmem:[%s0 + $0xa8] sm:$0xff]
    %v37 = vld [vmem:[%s0 + $0xb0] sm:$0xff]
    %v38 = vld [vmem:[%s0 + $0xb8] sm:$0xff]
    %v39 = vld [vmem:[%s0 + $0xc0] sm:$0xff]
    %v40 = vld [vmem:[%s0 + $0xc8] sm:$0xff]
    %v41 = vld [vmem:[%s0 + $0xd0] sm:$0xff]
    %v42 = vld [vmem:[%s0 + $0xd8] sm:$0xff]
    %v43 = vld [vmem:[%s0 + $0xe0] sm:$0xff]
    %v44 = vld [vmem:[%s0 + $0xe8] sm:$0xff]
    %v45 = vld [vmem:[%s0 + $0xf0] sm:$0xff]
    %v46 = vld [vmem:[%s0 + $0xf8] sm:$0xff]
    %v47 = vld [vmem:[%s1] sm:$0xff]
    %v48 = vld [vmem:[%s1 + $0x8] sm:$0xff]
    %v49 = vld [vmem:[%s1 + $0x10] sm:$0xff]
    %v50 = vld [vmem:[%s1 + $0x18] sm:$0xff]
    %v51 = vld [vmem:[%s1 + $0x20] sm:$0xff]
    %v52 = vld [vmem:[%s1 + $0x28] sm:$0xff]
    %v53 = vld [vmem:[%s1 + $0x30] sm:$0xff]
    %v54 = vld [vmem:[%s1 + $0x38] sm:$0xff]
    %v55 = vld [vmem:[%s1 + $0x40] sm:$0xff]
    %v56 = vld [vmem:[%s1 + $0x48] sm:$0xff]
    %v57 = vld [vmem:[%s1 + $0x50] sm:$0xff]
    %v58 = vld [vmem:[%s1 + $0x58] sm:$0xff]
    %v59 = vld [vmem:[%s1 + $0x60] sm:$0xff]
    %v60 = vld [vmem:[%s1 + $0x68] sm:$0xff]
    %v61 = vld [vmem:[%s1 + $0x70] sm:$0xff]
    %v62 = vld [vmem:[%s1 + $0x78] sm:$0xff]
    %v63 = vld [vmem:[%s2] sm:$0x1]
    %v65 = vlaneseq
    %v66 = vshrl.u32 %v65, 7
    %v67 = vsub.s32 0, %v66
    %v68 = vrot.slane %v63, %v67
    %70 = vmatprep.subr.mxu0 0.0
    %71 = vmatpush1.msra.mxu0 %v47
    %72 = vmatprep.subr.mxu0 0.0
    %73 = vmatpush1.msra.mxu0 %v48
    %74 = vmatprep.subr.mxu0 0.0
    %75 = vmatpush1.msra.mxu0 %v49
    %76 = vmatprep.subr.mxu0 0.0
    %77 = vmatpush1.msra.mxu0 %v50
    %78 = vmatprep.subr.mxu0 0.0
    %79 = vmatpush1.msra.mxu0 %v51
    %80 = vmatprep.subr.mxu0 0.0
    %81 = vmatpush1.msra.mxu0 %v52
    %82 = vmatprep.subr.mxu0 0.0
    %83 = vmatpush1.msra.mxu0 %v53
    %84 = vmatprep.subr.mxu0 0.0
    %85 = vmatpush1.msra.mxu0 %v54
    %86 = vmatprep.subr.mxu0 0.0
    %87 = vmatpush1.msra.mxu0 %v55
    %88 = vmatprep.subr.mxu0 0.0
    %89 = vmatpush1.msra.mxu0 %v56
    %90 = vmatprep.subr.mxu0 0.0
    %91 = vmatpush1.msra.mxu0 %v57
    %92 = vmatprep.subr.mxu0 0.0
    %93 = vmatpush1.msra.mxu0 %v58
    %94 = vmatprep.subr.mxu0 0.0
    %95 = vmatpush1.msra.mxu0 %v59
    %96 = vmatprep.subr.mxu0 0.0
    %97 = vmatpush1.msra.mxu0 %v60
    %98 = vmatprep.subr.mxu0 0.0
    %99 = vmatpush1.msra.mxu0 %v61
    %100 = vmatprep.subr.mxu0 0.0
    %101 = vmatpush1.msra.mxu0 %v62
    %102 = vmatprep.subr.mxu0 0.0
    %103 = vmatpush1.msra.mxu0 0.0
    %104 = vmatprep.subr.mxu0 0.0
    %105 = vmatpush1.msra.mxu0 0.0
    %106 = vmatprep.subr.mxu0 0.0
    %107 = vmatpush1.msra.mxu0 0.0
    %108 = vmatprep.subr.mxu0 0.0
    %109 = vmatpush1.msra.mxu0 0.0
    %110 = vmatprep.subr.mxu0 0.0
    %111 = vmatpush1.msra.mxu0 0.0
    %112 = vmatprep.subr.mxu0 0.0
    %113 = vmatpush1.msra.mxu0 0.0
    %114 = vmatprep.subr.mxu0 0.0
    %115 = vmatpush1.msra.mxu0 0.0
    %116 = vmatprep.subr.mxu0 0.0
    %117 = vmatpush1.msra.mxu0 0.0
    %118 = vmatprep.subr.mxu0 0.0
    %119 = vmatpush1.msra.mxu0 0.0
    %120 = vmatprep.subr.mxu0 0.0
    %121 = vmatpush1.msra.mxu0 0.0
    %122 = vmatprep.subr.mxu0 0.0
    %123 = vmatpush1.msra.mxu0 0.0
    %124 = vmatprep.subr.mxu0 0.0
    %125 = vmatpush1.msra.mxu0 0.0
    %126 = vmatprep.subr.mxu0 0.0
    %127 = vmatpush1.msra.mxu0 0.0
    %128 = vmatprep.subr.mxu0 0.0
    %129 = vmatpush1.msra.mxu0 0.0
    %130 = vmatprep.subr.mxu0 0.0
    %131 = vmatpush1.msra.mxu0 0.0
    %132 = vmatprep.subr.mxu0 0.0
    %133 = vmatpush1.msra.mxu0 0.0
    %134 = vmatprep.mubr.f32.mxu0 0.0
    %135 = vmatmul.mubr.f32.gmra.mrb[0].mxu0 %v15
    %v136 = vpop.f32.mrb[0].mxu0
    %v137 = vadd.f32 %v68, %v136
    %v138 = vpop.f32.mrb[0].mxu0
    %139 = vmatprep.mubr.f32.mxu0 0.0
    %140 = vmatmul.mubr.f32.gmra.mrb[0].mxu0 %v16
    %v141 = vpop.f32.mrb[0].mxu0
    %v142 = vadd.f32 %v68, %v141
    %v143 = vpop.f32.mrb[0].mxu0
    %144 = vmatprep.mubr.f32.mxu0 0.0
    %145 = vmatmul.mubr.f32.gmra.mrb[0].mxu0 %v17
    %v146 = vpop.f32.mrb[0].mxu0
    %v147 = vadd.f32 %v68, %v146
    %v148 = vpop.f32.mrb[0].mxu0
    %149 = vmatprep.mubr.f32.mxu0 0.0
    %150 = vmatmul.mubr.f32.gmra.mrb[0].mxu0 %v18
    %v151 = vpop.f32.mrb[0].mxu0
    %v152 = vadd.f32 %v68, %v151
    %v153 = vpop.f32.mrb[0].mxu0
    %154 = vmatprep.mubr.f32.mxu0 0.0
    %155 = vmatmul.mubr.f32.gmra.mrb[0].mxu0 %v19
    %v156 = vpop.f32.mrb[0].mxu0
    %v157 = vadd.f32 %v68, %v156
    %v158 = vpop.f32.mrb[0].mxu0
    %159 = vmatprep.mubr.f32.mxu0 0.0
    %160 = vmatmul.mubr.f32.gmra.mrb[0].mxu0 %v20
    %v161 = vpop.f32.mrb[0].mxu0
    %v162 = vadd.f32 %v68, %v161
    %v163 = vpop.f32.mrb[0].mxu0
    %164 = vmatprep.mubr.f32.mxu0 0.0
    %165 = vmatmul.mubr.f32.gmra.mrb[0].mxu0 %v21
    %v166 = vpop.f32.mrb[0].mxu0
    %v167 = vadd.f32 %v68, %v166
    %v168 = vpop.f32.mrb[0].mxu0
    %169 = vmatprep.mubr.f32.mxu0 0.0
    %170 = vmatmul.mubr.f32.gmra.mrb[0].mxu0 %v22
    %v171 = vpop.f32.mrb[0].mxu0
    %v172 = vadd.f32 %v68, %v171
    %v173 = vpop.f32.mrb[0].mxu0
    %174 = vmatprep.mubr.f32.mxu0 0.0
    %175 = vmatmul.mubr.f32.gmra.mrb[0].mxu0 %v23
    %v176 = vpop.f32.mrb[0].mxu0
    %v177 = vadd.f32 %v68, %v176
    %v178 = vpop.f32.mrb[0].mxu0
    %179 = vmatprep.mubr.f32.mxu0 0.0
    %180 = vmatmul.mubr.f32.gmra.mrb[0].mxu0 %v24
    %v181 = vpop.f32.mrb[0].mxu0
    %v182 = vadd.f32 %v68, %v181
    %v183 = vpop.f32.mrb[0].mxu0
    %184 = vmatprep.mubr.f32.mxu0 0.0
    %185 = vmatmul.mubr.f32.gmra.mrb[0].mxu0 %v25
    %v186 = vpop.f32.mrb[0].mxu0
    %v187 = vadd.f32 %v68, %v186
    %v188 = vpop.f32.mrb[0].mxu0
    %189 = vmatprep.mubr.f32.mxu0 0.0
    %190 = vmatmul.mubr.f32.gmra.mrb[0].mxu0 %v26
    %v191 = vpop.f32.mrb[0].mxu0
    %v192 = vadd.f32 %v68, %v191
    %v193 = vpop.f32.mrb[0].mxu0
    %194 = vmatprep.mubr.f32.mxu0 0.0
    %195 = vmatmul.mubr.f32.gmra.mrb[0].mxu0 %v27
    %v196 = vpop.f32.mrb[0].mxu0
    %v197 = vadd.f32 %v68, %v196
    %v198 = vpop.f32.mrb[0].mxu0
    %199 = vmatprep.mubr.f32.mxu0 0.0
    %200 = vmatmul.mubr.f32.gmra.mrb[0].mxu0 %v28
    %v201 = vpop.f32.mrb[0].mxu0
    %v202 = vadd.f32 %v68, %v201
    %v203 = vpop.f32.mrb[0].mxu0
    %204 = vmatprep.mubr.f32.mxu0 0.0
    %205 = vmatmul.mubr.f32.gmra.mrb[0].mxu0 %v29
    %v206 = vpop.f32.mrb[0].mxu0
    %v207 = vadd.f32 %v68, %v206
    %v208 = vpop.f32.mrb[0].mxu0
    %209 = vmatprep.mubr.f32.mxu0 0.0
    %210 = vmatmul.mubr.f32.gmra.mrb[0].mxu0 %v30
    %v211 = vpop.f32.mrb[0].mxu0
    %v212 = vadd.f32 %v68, %v211
    %v213 = vpop.f32.mrb[0].mxu0
    %214 = vmatprep.mubr.f32.mxu0 0.0
    %215 = vmatmul.mubr.f32.gmra.mrb[0].mxu0 %v31
    %v216 = vpop.f32.mrb[0].mxu0
    %v217 = vadd.f32 %v68, %v216
    %v218 = vpop.f32.mrb[0].mxu0
    %219 = vmatprep.mubr.f32.mxu0 0.0
    %220 = vmatmul.mubr.f32.gmra.mrb[0].mxu0 %v32
    %v221 = vpop.f32.mrb[0].mxu0
    %v222 = vadd.f32 %v68, %v221
    %v223 = vpop.f32.mrb[0].mxu0
    %224 = vmatprep.mubr.f32.mxu0 0.0
    %225 = vmatmul.mubr.f32.gmra.mrb[0].mxu0 %v33
    %v226 = vpop.f32.mrb[0].mxu0
    %v227 = vadd.f32 %v68, %v226
    %v228 = vpop.f32.mrb[0].mxu0
    %229 = vmatprep.mubr.f32.mxu0 0.0
    %230 = vmatmul.mubr.f32.gmra.mrb[0].mxu0 %v34
    %v231 = vpop.f32.mrb[0].mxu0
    %v232 = vadd.f32 %v68, %v231
    %v233 = vpop.f32.mrb[0].mxu0
    %234 = vmatprep.mubr.f32.mxu0 0.0
    %235 = vmatmul.mubr.f32.gmra.mrb[0].mxu0 %v35
    %v236 = vpop.f32.mrb[0].mxu0
    %v237 = vadd.f32 %v68, %v236
    %v238 = vpop.f32.mrb[0].mxu0
    %239 = vmatprep.mubr.f32.mxu0 0.0
    %240 = vmatmul.mubr.f32.gmra.mrb[0].mxu0 %v36
    %v241 = vpop.f32.mrb[0].mxu0
    %v242 = vadd.f32 %v68, %v241
    %v243 = vpop.f32.mrb[0].mxu0
    %244 = vmatprep.mubr.f32.mxu0 0.0
    %245 = vmatmul.mubr.f32.gmra.mrb[0].mxu0 %v37
    %v246 = vpop.f32.mrb[0].mxu0
    %v247 = vadd.f32 %v68, %v246
    %v248 = vpop.f32.mrb[0].mxu0
    %249 = vmatprep.mubr.f32.mxu0 0.0
    %250 = vmatmul.mubr.f32.gmra.mrb[0].mxu0 %v38
    %v251 = vpop.f32.mrb[0].mxu0
    %v252 = vadd.f32 %v68, %v251
    %v253 = vpop.f32.mrb[0].mxu0
    %254 = vmatprep.mubr.f32.mxu0 0.0
    %255 = vmatmul.mubr.f32.gmra.mrb[0].mxu0 %v39
    %v256 = vpop.f32.mrb[0].mxu0
    %v257 = vadd.f32 %v68, %v256
    %v258 = vpop.f32.mrb[0].mxu0
    %259 = vmatprep.mubr.f32.mxu0 0.0
    %260 = vmatmul.mubr.f32.gmra.mrb[0].mxu0 %v40
    %v261 = vpop.f32.mrb[0].mxu0
    %v262 = vadd.f32 %v68, %v261
    %v263 = vpop.f32.mrb[0].mxu0
    %264 = vmatprep.mubr.f32.mxu0 0.0
    %265 = vmatmul.mubr.f32.gmra.mrb[0].mxu0 %v41
    %v266 = vpop.f32.mrb[0].mxu0
    %v267 = vadd.f32 %v68, %v266
    %v268 = vpop.f32.mrb[0].mxu0
    %269 = vmatprep.mubr.f32.mxu0 0.0
    %270 = vmatmul.mubr.f32.gmra.mrb[0].mxu0 %v42
    %v271 = vpop.f32.mrb[0].mxu0
    %v272 = vadd.f32 %v68, %v271
    %v273 = vpop.f32.mrb[0].mxu0
    %274 = vmatprep.mubr.f32.mxu0 0.0
    %275 = vmatmul.mubr.f32.gmra.mrb[0].mxu0 %v43
    %v276 = vpop.f32.mrb[0].mxu0
    %v277 = vadd.f32 %v68, %v276
    %v278 = vpop.f32.mrb[0].mxu0
    %279 = vmatprep.mubr.f32.mxu0 0.0
    %280 = vmatmul.mubr.f32.gmra.mrb[0].mxu0 %v44
    %v281 = vpop.f32.mrb[0].mxu0
    %v282 = vadd.f32 %v68, %v281
    %v283 = vpop.f32.mrb[0].mxu0
    %284 = vmatprep.mubr.f32.mxu0 0.0
    %285 = vmatmul.mubr.f32.gmra.mrb[0].mxu0 %v45
    %v286 = vpop.f32.mrb[0].mxu0
    %v287 = vadd.f32 %v68, %v286
    %v288 = vpop.f32.mrb[0].mxu0
    %289 = vmatprep.mubr.f32.mxu0 0.0
    %290 = vmatmul.mubr.f32.gmra.mrb[0].mxu0 %v46
    %v291 = vpop.f32.mrb[0].mxu0
    %v292 = vadd.f32 %v68, %v291
    %v293 = vpop.f32.mrb[0].mxu0
    %294 = vdwg.mxu0
    %295 = vst [vmem:[#allocation2] sm:$0xff] %v137
    %296 = vst [vmem:[#allocation2 + $0x8] sm:$0xff] %v142
    %297 = vst [vmem:[#allocation2 + $0x10] sm:$0xff] %v147
    %298 = vst [vmem:[#allocation2 + $0x18] sm:$0xff] %v152
    %299 = vst [vmem:[#allocation2 + $0x20] sm:$0xff] %v157
    %300 = vst [vmem:[#allocation2 + $0x28] sm:$0xff] %v162
    %301 = vst [vmem:[#allocation2 + $0x30] sm:$0xff] %v167
    %302 = vst [vmem:[#allocation2 + $0x38] sm:$0xff] %v172
    %303 = vst [vmem:[#allocation2 + $0x40] sm:$0xff] %v177
    %304 = vst [vmem:[#allocation2 + $0x48] sm:$0xff] %v182
    %305 = vst [vmem:[#allocation2 + $0x50] sm:$0xff] %v187
    %306 = vst [vmem:[#allocation2 + $0x58] sm:$0xff] %v192
    %307 = vst [vmem:[#allocation2 + $0x60] sm:$0xff] %v197
    %308 = vst [vmem:[#allocation2 + $0x68] sm:$0xff] %v202
    %309 = vst [vmem:[#allocation2 + $0x70] sm:$0xff] %v207
    %310 = vst [vmem:[#allocation2 + $0x78] sm:$0xff] %v212
    %311 = vst [vmem:[#allocation2 + $0x80] sm:$0xff] %v217
    %312 = vst [vmem:[#allocation2 + $0x88] sm:$0xff] %v222
    %313 = vst [vmem:[#allocation2 + $0x90] sm:$0xff] %v227
    %314 = vst [vmem:[#allocation2 + $0x98] sm:$0xff] %v232
    %315 = vst [vmem:[#allocation2 + $0xa0] sm:$0xff] %v237
    %316 = vst [vmem:[#allocation2 + $0xa8] sm:$0xff] %v242
    %317 = vst [vmem:[#allocation2 + $0xb0] sm:$0xff] %v247
    %318 = vst [vmem:[#allocation2 + $0xb8] sm:$0xff] %v252
    %319 = vst [vmem:[#allocation2 + $0xc0] sm:$0xff] %v257
    %320 = vst [vmem:[#allocation2 + $0xc8] sm:$0xff] %v262
    %321 = vst [vmem:[#allocation2 + $0xd0] sm:$0xff] %v267
    %322 = vst [vmem:[#allocation2 + $0xd8] sm:$0xff] %v272
    %323 = vst [vmem:[#allocation2 + $0xe0] sm:$0xff] %v277
    %324 = vst [vmem:[#allocation2 + $0xe8] sm:$0xff] %v282
    %325 = vst [vmem:[#allocation2 + $0xf0] sm:$0xff] %v287
    %326 = vst [vmem:[#allocation2 + $0xf8] sm:$0xff] %v292
    // Predicated region
    $region14: #{_lambda_.3} parent=1 // pred_check
      _
    $region15: #{_lambda_.3} parent=1 // pred_check_branch
      %328 = sbr.rel (0) target = $region17
    $region16: #{_lambda_.3} parent=1 // pred_region
      %s330 = ssub.s32 4096, 4096
      %331 = vsyncadd [#allocation3], %s330
      %s332 = sshll.u32 [#allocation2], 4
      %s333 = int_to_ptr.vmem [resolvable:$true] %s332
      %338 = dma.vmem_to_hbm [thread:$0]  %s333, 4096, %s3, [#allocation3], 128, 128, 8
    $region17: #{_lambda_.3} parent=1 // pred_fallthru
      _
    // Predicated region
    $region18: #{_lambda_.3} parent=1 // pred_check
      _
    $region19: #{_lambda_.3} parent=1 // pred_check_branch
      %340 = sbr.rel (0) target = $region21
    $region20: #{_lambda_.3} parent=1 // pred_region
      %341 = dma.done [#allocation3], 4096
    $region21: #{_lambda_.3} parent=1 // pred_fallthru
      _
    %342 = vsyncpa [#allocation3], 1

// kernel: _lambda_.2
$region0: #{_lambda_.2}
  #allocation0 [shape = 'u32[]', space=smem, size = 0x4, offset = 0x4, fixed_abs, tag = 'smem constant byte address 0x4 - core index']
  #allocation1 [shape = 'u32[144,128]{1,0:T(1,128)}', space=vmem, size = 0x12000, scoped, tag = 'internal scratch']
  #allocation2 [shape = 'f32[128,128]{1,0:T(8,128)}', space=vmem, size = 0x10000, scoped, tag = 'scratch operand']
  #allocation3 [shape = 'f32[1,128]{1,0:T(1,128)}', space=vmem, size = 0x200, scoped, tag = 'scratch operand']
  %s0 = inlined_call_operand.hbm [shape: f32[256,128], index: 0, kind: input, shape index: {}]
  %s1 = inlined_call_operand.vmem [shape: f32[1,128], index: 1, kind: input, shape index: {}]
  %s2 = inlined_call_operand.vmem [shape: f32[1,128], index: 2, kind: input, shape index: {}]
  %s3 = inlined_call_operand.vmem [shape: f32[128,128], index: 3, kind: output, shape index: {0}]
  %s4 = inlined_call_operand.vmem [shape: f32[1,128], index: 4, kind: output, shape index: {1}]
  %5 = xla_tuple %s3, %s4
  %s6 = sld [smem:[#allocation0]]
  $region42: #{_lambda_.2} parent=0
    _
  %s8 = ssub.s32 1, %s6
  %s9 = scalar_select 0, %s8, %s6
  $region1: #{_lambda_.2} parent=0
    #allocation4 [shape = 'u8[131072]{0}', space=vmem, size = 0x20000, scoped, tag = 'input window, operand 0, single buffered']
    #allocation5 [shape = 's32[1]{0}', space=sflag, size = 0x4, scoped, tag = 'scoped memory for _lambda_.2']
    %10 = vsyncpa [#allocation5], 0
    // Predicated region
    $region2: #{_lambda_.2} parent=1 // pred_check
      _
    $region3: #{_lambda_.2} parent=1 // pred_check_branch
      %12 = sbr.rel (0) target = $region5
    $region4: #{_lambda_.2} parent=1 // pred_region
      %s14 = ssub.s32 4096, 4096
      %15 = vsyncadd [#allocation5], %s14
      %s16 = sshll.u32 [#allocation4], 4
      %s17 = int_to_ptr.vmem [resolvable:$true] %s16
      %22 = dma.hbm_to_vmem [thread:$0]  %s0, 4096, %s17, [#allocation5], 128, 128, 8
    $region5: #{_lambda_.2} parent=1 // pred_fallthru
      _
    // Predicated region
    $region6: #{_lambda_.2} parent=1 // pred_check
      _
    $region7: #{_lambda_.2} parent=1 // pred_check_branch
      %24 = sbr.rel (0) target = $region9
    $region8: #{_lambda_.2} parent=1 // pred_region
      _
    $region9: #{_lambda_.2} parent=1 // pred_fallthru
      _
    // Predicated region
    $region10: #{_lambda_.2} parent=1 // pred_check
      _
    $region11: #{_lambda_.2} parent=1 // pred_check_branch
      %26 = sbr.rel (0) target = $region13
    $region12: #{_lambda_.2} parent=1 // pred_region
      _
    $region13: #{_lambda_.2} parent=1 // pred_fallthru
      _
    // Predicated region
    $region14: #{_lambda_.2} parent=1 // pred_check
      _
    $region15: #{_lambda_.2} parent=1 // pred_check_branch
      %28 = sbr.rel (0) target = $region17
    $region16: #{_lambda_.2} parent=1 // pred_region
      %29 = dma.done [#allocation5], 4096
    $region17: #{_lambda_.2} parent=1 // pred_fallthru
      _
    %p30 = scmp.eq.s32.totalorder 0, 0
    // Predicated region
    $region18: #{_lambda_.2} parent=1 // pred_check
      %p31 = pneg %p30
    $region19: #{_lambda_.2} parent=1 // pred_check_branch
      %33 = sbr.rel (%p31) target = $region21
    $region20: #{_lambda_.2} parent=1 // pred_region
      %34 = vst [vmem:[#allocation2] sm:$0xff] 0.0
      %35 = vst [vmem:[#allocation2 + $0x8] sm:$0xff] 0.0
      %36 = vst [vmem:[#allocation2 + $0x10] sm:$0xff] 0.0
      %37 = vst [vmem:[#allocation2 + $0x18] sm:$0xff] 0.0
      %38 = vst [vmem:[#allocation2 + $0x20] sm:$0xff] 0.0
      %39 = vst [vmem:[#allocation2 + $0x28] sm:$0xff] 0.0
      %40 = vst [vmem:[#allocation2 + $0x30] sm:$0xff] 0.0
      %41 = vst [vmem:[#allocation2 + $0x38] sm:$0xff] 0.0
      %42 = vst [vmem:[#allocation2 + $0x40] sm:$0xff] 0.0
      %43 = vst [vmem:[#allocation2 + $0x48] sm:$0xff] 0.0
      %44 = vst [vmem:[#allocation2 + $0x50] sm:$0xff] 0.0
      %45 = vst [vmem:[#allocation2 + $0x58] sm:$0xff] 0.0
      %46 = vst [vmem:[#allocation2 + $0x60] sm:$0xff] 0.0
      %47 = vst [vmem:[#allocation2 + $0x68] sm:$0xff] 0.0
      %48 = vst [vmem:[#allocation2 + $0x70] sm:$0xff] 0.0
      %49 = vst [vmem:[#allocation2 + $0x78] sm:$0xff] 0.0
      %50 = vst [vmem:[#allocation3] sm:$0x1] 0.0
    $region21: #{_lambda_.2} parent=1 // pred_fallthru
      _
    %v51 = vld [vmem:[#allocation4] sm:$0xff]
    %v52 = vld [vmem:[#allocation4 + $0x8] sm:$0xff]
    %v53 = vld [vmem:[#allocation4 + $0x10] sm:$0xff]
    %v54 = vld [vmem:[#allocation4 + $0x18] sm:$0xff]
    %v55 = vld [vmem:[#allocation4 + $0x20] sm:$0xff]
    %v56 = vld [vmem:[#allocation4 + $0x28] sm:$0xff]
    %v57 = vld [vmem:[#allocation4 + $0x30] sm:$0xff]
    %v58 = vld [vmem:[#allocation4 + $0x38] sm:$0xff]
    %v59 = vld [vmem:[#allocation4 + $0x40] sm:$0xff]
    %v60 = vld [vmem:[#allocation4 + $0x48] sm:$0xff]
    %v61 = vld [vmem:[#allocation4 + $0x50] sm:$0xff]
    %v62 = vld [vmem:[#allocation4 + $0x58] sm:$0xff]
    %v63 = vld [vmem:[#allocation4 + $0x60] sm:$0xff]
    %v64 = vld [vmem:[#allocation4 + $0x68] sm:$0xff]
    %v65 = vld [vmem:[#allocation4 + $0x70] sm:$0xff]
    %v66 = vld [vmem:[#allocation4 + $0x78] sm:$0xff]
    %v67 = vld [vmem:[#allocation4 + $0x80] sm:$0xff]
    %v68 = vld [vmem:[#allocation4 + $0x88] sm:$0xff]
    %v69 = vld [vmem:[#allocation4 + $0x90] sm:$0xff]
    %v70 = vld [vmem:[#allocation4 + $0x98] sm:$0xff]
    %v71 = vld [vmem:[#allocation4 + $0xa0] sm:$0xff]
    %v72 = vld [vmem:[#allocation4 + $0xa8] sm:$0xff]
    %v73 = vld [vmem:[#allocation4 + $0xb0] sm:$0xff]
    %v74 = vld [vmem:[#allocation4 + $0xb8] sm:$0xff]
    %v75 = vld [vmem:[#allocation4 + $0xc0] sm:$0xff]
    %v76 = vld [vmem:[#allocation4 + $0xc8] sm:$0xff]
    %v77 = vld [vmem:[#allocation4 + $0xd0] sm:$0xff]
    %v78 = vld [vmem:[#allocation4 + $0xd8] sm:$0xff]
    %v79 = vld [vmem:[#allocation4 + $0xe0] sm:$0xff]
    %v80 = vld [vmem:[#allocation4 + $0xe8] sm:$0xff]
    %v81 = vld [vmem:[#allocation4 + $0xf0] sm:$0xff]
    %v82 = vld [vmem:[#allocation4 + $0xf8] sm:$0xff]
    %v83 = vld [vmem:[#allocation2] sm:$0xff]
    %v84 = vld [vmem:[#allocation2 + $0x8] sm:$0xff]
    %v85 = vld [vmem:[#allocation2 + $0x10] sm:$0xff]
    %v86 = vld [vmem:[#allocation2 + $0x18] sm:$0xff]
    %v87 = vld [vmem:[#allocation2 + $0x20] sm:$0xff]
    %v88 = vld [vmem:[#allocation2 + $0x28] sm:$0xff]
    %v89 = vld [vmem:[#allocation2 + $0x30] sm:$0xff]
    %v90 = vld [vmem:[#allocation2 + $0x38] sm:$0xff]
    %v91 = vld [vmem:[#allocation2 + $0x40] sm:$0xff]
    %v92 = vld [vmem:[#allocation2 + $0x48] sm:$0xff]
    %v93 = vld [vmem:[#allocation2 + $0x50] sm:$0xff]
    %v94 = vld [vmem:[#allocation2 + $0x58] sm:$0xff]
    %v95 = vld [vmem:[#allocation2 + $0x60] sm:$0xff]
    %v96 = vld [vmem:[#allocation2 + $0x68] sm:$0xff]
    %v97 = vld [vmem:[#allocation2 + $0x70] sm:$0xff]
    %v98 = vld [vmem:[#allocation2 + $0x78] sm:$0xff]
    %99 = vxpose.xlu0.b32.start [1/16] %v51, 128
    %100 = vxpose.xlu0.b32.cont [2/16] %v52, 128
    %101 = vxpose.xlu0.b32.cont [3/16] %v53, 128
    %102 = vxpose.xlu0.b32.cont [4/16] %v54, 128
    %103 = vxpose.xlu0.b32.cont [5/16] %v55, 128
    %104 = vxpose.xlu0.b32.cont [6/16] %v56, 128
    %105 = vxpose.xlu0.b32.cont [7/16] %v57, 128
    %106 = vxpose.xlu0.b32.cont [8/16] %v58, 128
    %107 = vxpose.xlu0.b32.cont [9/16] %v59, 128
    %108 = vxpose.xlu0.b32.cont [10/16] %v60, 128
    %109 = vxpose.xlu0.b32.cont [11/16] %v61, 128
    %110 = vxpose.xlu0.b32.cont [12/16] %v62, 128
    %111 = vxpose.xlu0.b32.cont [13/16] %v63, 128
    %112 = vxpose.xlu0.b32.cont [14/16] %v64, 128
    %113 = vxpose.xlu0.b32.cont [15/16] %v65, 128
    %114 = vxpose.xlu0.b32.end [16/16] %v66, 128
    %v115 = vpop.trf.xlu0
    %v116 = vpop.trf.xlu0
    %v117 = vpop.trf.xlu0
    %v118 = vpop.trf.xlu0
    %v119 = vpop.trf.xlu0
    %v120 = vpop.trf.xlu0
    %v121 = vpop.trf.xlu0
    %v122 = vpop.trf.xlu0
    %v123 = vpop.trf.xlu0
    %v124 = vpop.trf.xlu0
    %v125 = vpop.trf.xlu0
    %v126 = vpop.trf.xlu0
    %v127 = vpop.trf.xlu0
    %v128 = vpop.trf.xlu0
    %v129 = vpop.trf.xlu0
    %v130 = vpop.trf.xlu0
    %131 = vxpose.xlu0.b32.start [1/16] %v67, 128
    %132 = vxpose.xlu0.b32.cont [2/16] %v68, 128
    %133 = vxpose.xlu0.b32.cont [3/16] %v69, 128
    %134 = vxpose.xlu0.b32.cont [4/16] %v70, 128
    %135 = vxpose.xlu0.b32.cont [5/16] %v71, 128
    %136 = vxpose.xlu0.b32.cont [6/16] %v72, 128
    %137 = vxpose.xlu0.b32.cont [7/16] %v73, 128
    %138 = vxpose.xlu0.b32.cont [8/16] %v74, 128
    %139 = vxpose.xlu0.b32.cont [9/16] %v75, 128
    %140 = vxpose.xlu0.b32.cont [10/16] %v76, 128
    %141 = vxpose.xlu0.b32.cont [11/16] %v77, 128
    %142 = vxpose.xlu0.b32.cont [12/16] %v78, 128
    %143 = vxpose.xlu0.b32.cont [13/16] %v79, 128
    %144 = vxpose.xlu0.b32.cont [14/16] %v80, 128
    %145 = vxpose.xlu0.b32.cont [15/16] %v81, 128
    %146 = vxpose.xlu0.b32.end [16/16] %v82, 128
    %v147 = vpop.trf.xlu0
    %v148 = vpop.trf.xlu0
    %v149 = vpop.trf.xlu0
    %v150 = vpop.trf.xlu0
    %v151 = vpop.trf.xlu0
    %v152 = vpop.trf.xlu0
    %v153 = vpop.trf.xlu0
    %v154 = vpop.trf.xlu0
    %v155 = vpop.trf.xlu0
    %v156 = vpop.trf.xlu0
    %v157 = vpop.trf.xlu0
    %v158 = vpop.trf.xlu0
    %v159 = vpop.trf.xlu0
    %v160 = vpop.trf.xlu0
    %v161 = vpop.trf.xlu0
    %v162 = vpop.trf.xlu0
    %163 = vmatprep.subr.mxu0 0.0
    %164 = vmatpush1.msra.mxu0 %v51
    %165 = vmatprep.subr.mxu0 0.0
    %166 = vmatpush1.msra.mxu0 %v52
    %167 = vmatprep.subr.mxu0 0.0
    %168 = vmatpush1.msra.mxu0 %v53
    %169 = vmatprep.subr.mxu0 0.0
    %170 = vmatpush1.msra.mxu0 %v54
    %171 = vmatprep.subr.mxu0 0.0
    %172 = vmatpush1.msra.mxu0 %v55
    %173 = vmatprep.subr.mxu0 0.0
    %174 = vmatpush1.msra.mxu0 %v56
    %175 = vmatprep.subr.mxu0 0.0
    %176 = vmatpush1.msra.mxu0 %v57
    %177 = vmatprep.subr.mxu0 0.0
    %178 = vmatpush1.msra.mxu0 %v58
    %179 = vmatprep.subr.mxu0 0.0
    %180 = vmatpush1.msra.mxu0 %v59
    %181 = vmatprep.subr.mxu0 0.0
    %182 = vmatpush1.msra.mxu0 %v60
    %183 = vmatprep.subr.mxu0 0.0
    %184 = vmatpush1.msra.mxu0 %v61
    %185 = vmatprep.subr.mxu0 0.0
    %186 = vmatpush1.msra.mxu0 %v62
    %187 = vmatprep.subr.mxu0 0.0
    %188 = vmatpush1.msra.mxu0 %v63
    %189 = vmatprep.subr.mxu0 0.0
    %190 = vmatpush1.msra.mxu0 %v64
    %191 = vmatprep.subr.mxu0 0.0
    %192 = vmatpush1.msra.mxu0 %v65
    %193 = vmatprep.subr.mxu0 0.0
    %194 = vmatpush1.msra.mxu0 %v66
    %195 = vmatprep.subr.mxu0 0.0
    %196 = vmatpush1.msra.mxu0 %v67
    %197 = vmatprep.subr.mxu0 0.0
    %198 = vmatpush1.msra.mxu0 %v68
    %199 = vmatprep.subr.mxu0 0.0
    %200 = vmatpush1.msra.mxu0 %v69
    %201 = vmatprep.subr.mxu0 0.0
    %202 = vmatpush1.msra.mxu0 %v70
    %203 = vmatprep.subr.mxu0 0.0
    %204 = vmatpush1.msra.mxu0 %v71
    %205 = vmatprep.subr.mxu0 0.0
    %206 = vmatpush1.msra.mxu0 %v72
    %207 = vmatprep.subr.mxu0 0.0
    %208 = vmatpush1.msra.mxu0 %v73
    %209 = vmatprep.subr.mxu0 0.0
    %210 = vmatpush1.msra.mxu0 %v74
    %211 = vmatprep.subr.mxu0 0.0
    %212 = vmatpush1.msra.mxu0 %v75
    %213 = vmatprep.subr.mxu0 0.0
    %214 = vmatpush1.msra.mxu0 %v76
    %215 = vmatprep.subr.mxu0 0.0
    %216 = vmatpush1.msra.mxu0 %v77
    %217 = vmatprep.subr.mxu0 0.0
    %218 = vmatpush1.msra.mxu0 %v78
    %219 = vmatprep.subr.mxu0 0.0
    %220 = vmatpush1.msra.mxu0 %v79
    %221 = vmatprep.subr.mxu0 0.0
    %222 = vmatpush1.msra.mxu0 %v80
    %223 = vmatprep.subr.mxu0 0.0
    %224 = vmatpush1.msra.mxu0 %v81
    %225 = vmatprep.subr.mxu0 0.0
    %226 = vmatpush1.msra.mxu0 %v82
    %227 = vmatprep.mubr.f32.mxu0 %v147
    %228 = vmatmul.mubr.f32.gmra.mrb[0].mxu0 %v115
    %v229 = vpop.f32.mrb[0].mxu0
    %v230 = vadd.f32 0.0, %v229
    %v231 = vpop.f32.mrb[0].mxu0
    %232 = vmatprep.mubr.f32.mxu0 %v148
    %233 = vmatmul.mubr.f32.gmra.mrb[0].mxu0 %v116
    %v234 = vpop.f32.mrb[0].mxu0
    %v235 = vadd.f32 0.0, %v234
    %v236 = vpop.f32.mrb[0].mxu0
    %237 = vmatprep.mubr.f32.mxu0 %v149
    %238 = vmatmul.mubr.f32.gmra.mrb[0].mxu0 %v117
    %v239 = vpop.f32.mrb[0].mxu0
    %v240 = vadd.f32 0.0, %v239
    %v241 = vpop.f32.mrb[0].mxu0
    %242 = vmatprep.mubr.f32.mxu0 %v150
    %243 = vmatmul.mubr.f32.gmra.mrb[0].mxu0 %v118
    %v244 = vpop.f32.mrb[0].mxu0
    %v245 = vadd.f32 0.0, %v244
    %v246 = vpop.f32.mrb[0].mxu0
    %247 = vmatprep.mubr.f32.mxu0 %v151
    %248 = vmatmul.mubr.f32.gmra.mrb[0].mxu0 %v119
    %v249 = vpop.f32.mrb[0].mxu0
    %v250 = vadd.f32 0.0, %v249
    %v251 = vpop.f32.mrb[0].mxu0
    %252 = vmatprep.mubr.f32.mxu0 %v152
    %253 = vmatmul.mubr.f32.gmra.mrb[0].mxu0 %v120
    %v254 = vpop.f32.mrb[0].mxu0
    %v255 = vadd.f32 0.0, %v254
    %v256 = vpop.f32.mrb[0].mxu0
    %257 = vmatprep.mubr.f32.mxu0 %v153
    %258 = vmatmul.mubr.f32.gmra.mrb[0].mxu0 %v121
    %v259 = vpop.f32.mrb[0].mxu0
    %v260 = vadd.f32 0.0, %v259
    %v261 = vpop.f32.mrb[0].mxu0
    %262 = vmatprep.mubr.f32.mxu0 %v154
    %263 = vmatmul.mubr.f32.gmra.mrb[0].mxu0 %v122
    %v264 = vpop.f32.mrb[0].mxu0
    %v265 = vadd.f32 0.0, %v264
    %v266 = vpop.f32.mrb[0].mxu0
    %267 = vmatprep.mubr.f32.mxu0 %v155
    %268 = vmatmul.mubr.f32.gmra.mrb[0].mxu0 %v123
    %v269 = vpop.f32.mrb[0].mxu0
    %v270 = vadd.f32 0.0, %v269
    %v271 = vpop.f32.mrb[0].mxu0
    %272 = vmatprep.mubr.f32.mxu0 %v156
    %273 = vmatmul.mubr.f32.gmra.mrb[0].mxu0 %v124
    %v274 = vpop.f32.mrb[0].mxu0
    %v275 = vadd.f32 0.0, %v274
    %v276 = vpop.f32.mrb[0].mxu0
    %277 = vmatprep.mubr.f32.mxu0 %v157
    %278 = vmatmul.mubr.f32.gmra.mrb[0].mxu0 %v125
    %v279 = vpop.f32.mrb[0].mxu0
    %v280 = vadd.f32 0.0, %v279
    %v281 = vpop.f32.mrb[0].mxu0
    %282 = vmatprep.mubr.f32.mxu0 %v158
    %283 = vmatmul.mubr.f32.gmra.mrb[0].mxu0 %v126
    %v284 = vpop.f32.mrb[0].mxu0
    %v285 = vadd.f32 0.0, %v284
    %v286 = vpop.f32.mrb[0].mxu0
    %287 = vmatprep.mubr.f32.mxu0 %v159
    %288 = vmatmul.mubr.f32.gmra.mrb[0].mxu0 %v127
    %v289 = vpop.f32.mrb[0].mxu0
    %v290 = vadd.f32 0.0, %v289
    %v291 = vpop.f32.mrb[0].mxu0
    %292 = vmatprep.mubr.f32.mxu0 %v160
    %293 = vmatmul.mubr.f32.gmra.mrb[0].mxu0 %v128
    %v294 = vpop.f32.mrb[0].mxu0
    %v295 = vadd.f32 0.0, %v294
    %v296 = vpop.f32.mrb[0].mxu0
    %297 = vmatprep.mubr.f32.mxu0 %v161
    %298 = vmatmul.mubr.f32.gmra.mrb[0].mxu0 %v129
    %v299 = vpop.f32.mrb[0].mxu0
    %v300 = vadd.f32 0.0, %v299
    %v301 = vpop.f32.mrb[0].mxu0
    %302 = vmatprep.mubr.f32.mxu0 %v162
    %303 = vmatmul.mubr.f32.gmra.mrb[0].mxu0 %v130
    %v304 = vpop.f32.mrb[0].mxu0
    %v305 = vadd.f32 0.0, %v304
    %v306 = vpop.f32.mrb[0].mxu0
    %307 = vdwg.mxu0
    %v308 = vadd.f32 %v83, %v230
    %v309 = vadd.f32 %v84, %v235
    %v310 = vadd.f32 %v85, %v240
    %v311 = vadd.f32 %v86, %v245
    %v312 = vadd.f32 %v87, %v250
    %v313 = vadd.f32 %v88, %v255
    %v314 = vadd.f32 %v89, %v260
    %v315 = vadd.f32 %v90, %v265
    %v316 = vadd.f32 %v91, %v270
    %v317 = vadd.f32 %v92, %v275
    %v318 = vadd.f32 %v93, %v280
    %v319 = vadd.f32 %v94, %v285
    %v320 = vadd.f32 %v95, %v290
    %v321 = vadd.f32 %v96, %v295
    %v322 = vadd.f32 %v97, %v300
    %v323 = vadd.f32 %v98, %v305
    %324 = vst [vmem:[#allocation2] sm:$0xff] %v308
    %325 = vst [vmem:[#allocation2 + $0x8] sm:$0xff] %v309
    %326 = vst [vmem:[#allocation2 + $0x10] sm:$0xff] %v310
    %327 = vst [vmem:[#allocation2 + $0x18] sm:$0xff] %v311
    %328 = vst [vmem:[#allocation2 + $0x20] sm:$0xff] %v312
    %329 = vst [vmem:[#allocation2 + $0x28] sm:$0xff] %v313
    %330 = vst [vmem:[#allocation2 + $0x30] sm:$0xff] %v314
    %331 = vst [vmem:[#allocation2 + $0x38] sm:$0xff] %v315
    %332 = vst [vmem:[#allocation2 + $0x40] sm:$0xff] %v316
    %333 = vst [vmem:[#allocation2 + $0x48] sm:$0xff] %v317
    %334 = vst [vmem:[#allocation2 + $0x50] sm:$0xff] %v318
    %335 = vst [vmem:[#allocation2 + $0x58] sm:$0xff] %v319
    %336 = vst [vmem:[#allocation2 + $0x60] sm:$0xff] %v320
    %337 = vst [vmem:[#allocation2 + $0x68] sm:$0xff] %v321
    %338 = vst [vmem:[#allocation2 + $0x70] sm:$0xff] %v322
    %339 = vst [vmem:[#allocation2 + $0x78] sm:$0xff] %v323
    %v340 = vld [vmem:[#allocation3] sm:$0x1]
    %v341 = vadd.f32 %v51, %v52
    %v342 = vadd.f32 %v341, %v53
    %v343 = vadd.f32 %v342, %v54
    %v344 = vadd.f32 %v343, %v55
    %v345 = vadd.f32 %v344, %v56
    %v346 = vadd.f32 %v345, %v57
    %v347 = vadd.f32 %v346, %v58
    %v348 = vadd.f32 %v347, %v59
    %v349 = vadd.f32 %v348, %v60
    %v350 = vadd.f32 %v349, %v61
    %v351 = vadd.f32 %v350, %v62
    %v352 = vadd.f32 %v351, %v63
    %v353 = vadd.f32 %v352, %v64
    %v354 = vadd.f32 %v353, %v65
    %v355 = vadd.f32 %v354, %v66
    %v356 = vadd.f32 %v355, %v67
    %v357 = vadd.f32 %v356, %v68
    %v358 = vadd.f32 %v357, %v69
    %v359 = vadd.f32 %v358, %v70
    %v360 = vadd.f32 %v359, %v71
    %v361 = vadd.f32 %v360, %v72
    %v362 = vadd.f32 %v361, %v73
    %v363 = vadd.f32 %v362, %v74
    %v364 = vadd.f32 %v363, %v75
    %v365 = vadd.f32 %v364, %v76
    %v366 = vadd.f32 %v365, %v77
    %v367 = vadd.f32 %v366, %v78
    %v368 = vadd.f32 %v367, %v79
    %v369 = vadd.f32 %v368, %v80
    %v370 = vadd.f32 %v369, %v81
    %v371 = vadd.f32 %v370, %v82
    %v372 = vrot.slane %v371, 4
    %v373 = vadd.f32 %v371, %v372
    %v374 = vrot.slane %v373, 2
    %v375 = vadd.f32 %v373, %v374
    %v376 = vrot.slane %v375, 1
    %v377 = vadd.f32 %v375, %v376
    %v378 = vadd.f32 %v340, %v377
    %379 = vst [vmem:[#allocation3] sm:$0x1] %v378
    // Predicated region
    $region22: #{_lambda_.2} parent=1 // pred_check
      %p380 = pneg %p30
    $region23: #{_lambda_.2} parent=1 // pred_check_branch
      %382 = sbr.rel (%p380) target = $region25
    $region24: #{_lambda_.2} parent=1 // pred_region
      %v383 = vld [vmem:[#allocation2] sm:$0xff]
      %v384 = vld [vmem:[#allocation2 + $0x8] sm:$0xff]
      %v385 = vld [vmem:[#allocation2 + $0x10] sm:$0xff]
      %v386 = vld [vmem:[#allocation2 + $0x18] sm:$0xff]
      %v387 = vld [vmem:[#allocation2 + $0x20] sm:$0xff]
      %v388 = vld [vmem:[#allocation2 + $0x28] sm:$0xff]
      %v389 = vld [vmem:[#allocation2 + $0x30] sm:$0xff]
      %v390 = vld [vmem:[#allocation2 + $0x38] sm:$0xff]
      %v391 = vld [vmem:[#allocation2 + $0x40] sm:$0xff]
      %v392 = vld [vmem:[#allocation2 + $0x48] sm:$0xff]
      %v393 = vld [vmem:[#allocation2 + $0x50] sm:$0xff]
      %v394 = vld [vmem:[#allocation2 + $0x58] sm:$0xff]
      %v395 = vld [vmem:[#allocation2 + $0x60] sm:$0xff]
      %v396 = vld [vmem:[#allocation2 + $0x68] sm:$0xff]
      %v397 = vld [vmem:[#allocation2 + $0x70] sm:$0xff]
      %v398 = vld [vmem:[#allocation2 + $0x78] sm:$0xff]
      %399 = vmax.xlane.f32.xlu0 %v383
      %v400 = vpop.xlane.xlu0 %399
      %401 = vmax.xlane.f32.xlu0 %v384
      %v402 = vpop.xlane.xlu0 %401
      %403 = vmax.xlane.f32.xlu0 %v385
      %v404 = vpop.xlane.xlu0 %403
      %405 = vmax.xlane.f32.xlu0 %v386
      %v406 = vpop.xlane.xlu0 %405
      %407 = vmax.xlane.f32.xlu0 %v387
      %v408 = vpop.xlane.xlu0 %407
      %409 = vmax.xlane.f32.xlu0 %v388
      %v410 = vpop.xlane.xlu0 %409
      %411 = vmax.xlane.f32.xlu0 %v389
      %v412 = vpop.xlane.xlu0 %411
      %413 = vmax.xlane.f32.xlu0 %v390
      %v414 = vpop.xlane.xlu0 %413
      %415 = vmax.xlane.f32.xlu0 %v391
      %v416 = vpop.xlane.xlu0 %415
      %417 = vmax.xlane.f32.xlu0 %v392
      %v418 = vpop.xlane.xlu0 %417
      %419 = vmax.xlane.f32.xlu0 %v393
      %v420 = vpop.xlane.xlu0 %419
      %421 = vmax.xlane.f32.xlu0 %v394
      %v422 = vpop.xlane.xlu0 %421
      %423 = vmax.xlane.f32.xlu0 %v395
      %v424 = vpop.xlane.xlu0 %423
      %425 = vmax.xlane.f32.xlu0 %v396
      %v426 = vpop.xlane.xlu0 %425
      %427 = vmax.xlane.f32.xlu0 %v397
      %v428 = vpop.xlane.xlu0 %427
      %429 = vmax.xlane.f32.xlu0 %v398
      %v430 = vpop.xlane.xlu0 %429
      %v431 = vsub.f32 %v383, %v400
      %v432 = vsub.f32 %v384, %v402
      %v433 = vsub.f32 %v385, %v404
      %v434 = vsub.f32 %v386, %v406
      %v435 = vsub.f32 %v387, %v408
      %v436 = vsub.f32 %v388, %v410
      %v437 = vsub.f32 %v389, %v412
      %v438 = vsub.f32 %v390, %v414
      %v439 = vsub.f32 %v391, %v416
      %v440 = vsub.f32 %v392, %v418
      %v441 = vsub.f32 %v393, %v420
      %v442 = vsub.f32 %v394, %v422
      %v443 = vsub.f32 %v395, %v424
      %v444 = vsub.f32 %v396, %v426
      %v445 = vsub.f32 %v397, %v428
      %v446 = vsub.f32 %v398, %v430
      %v447 = vmul.f32 %v431, 1.442695
      %v448 = vpow.pop %v447
      %v449 = vmul.f32 %v432, 1.442695
      %v450 = vpow.pop %v449
      %v451 = vmul.f32 %v433, 1.442695
      %v452 = vpow.pop %v451
      %v453 = vmul.f32 %v434, 1.442695
      %v454 = vpow.pop %v453
      %v455 = vmul.f32 %v435, 1.442695
      %v456 = vpow.pop %v455
      %v457 = vmul.f32 %v436, 1.442695
      %v458 = vpow.pop %v457
      %v459 = vmul.f32 %v437, 1.442695
      %v460 = vpow.pop %v459
      %v461 = vmul.f32 %v438, 1.442695
      %v462 = vpow.pop %v461
      %v463 = vmul.f32 %v439, 1.442695
      %v464 = vpow.pop %v463
      %v465 = vmul.f32 %v440, 1.442695
      %v466 = vpow.pop %v465
      %v467 = vmul.f32 %v441, 1.442695
      %v468 = vpow.pop %v467
      %v469 = vmul.f32 %v442, 1.442695
      %v470 = vpow.pop %v469
      %v471 = vmul.f32 %v443, 1.442695
      %v472 = vpow.pop %v471
      %v473 = vmul.f32 %v444, 1.442695
      %v474 = vpow.pop %v473
      %v475 = vmul.f32 %v445, 1.442695
      %v476 = vpow.pop %v475
      %v477 = vmul.f32 %v446, 1.442695
      %v478 = vpow.pop %v477
      %479 = vadd.xlane.f32.xlu0 %v448
      %v480 = vpop.xlane.xlu0 %479
      %481 = vadd.xlane.f32.xlu0 %v450
      %v482 = vpop.xlane.xlu0 %481
      %483 = vadd.xlane.f32.xlu0 %v452
      %v484 = vpop.xlane.xlu0 %483
      %485 = vadd.xlane.f32.xlu0 %v454
      %v486 = vpop.xlane.xlu0 %485
      %487 = vadd.xlane.f32.xlu0 %v456
      %v488 = vpop.xlane.xlu0 %487
      %489 = vadd.xlane.f32.xlu0 %v458
      %v490 = vpop.xlane.xlu0 %489
      %491 = vadd.xlane.f32.xlu0 %v460
      %v492 = vpop.xlane.xlu0 %491
      %493 = vadd.xlane.f32.xlu0 %v462
      %v494 = vpop.xlane.xlu0 %493
      %495 = vadd.xlane.f32.xlu0 %v464
      %v496 = vpop.xlane.xlu0 %495
      %497 = vadd.xlane.f32.xlu0 %v466
      %v498 = vpop.xlane.xlu0 %497
      %499 = vadd.xlane.f32.xlu0 %v468
      %v500 = vpop.xlane.xlu0 %499
      %501 = vadd.xlane.f32.xlu0 %v470
      %v502 = vpop.xlane.xlu0 %501
      %503 = vadd.xlane.f32.xlu0 %v472
      %v504 = vpop.xlane.xlu0 %503
      %505 = vadd.xlane.f32.xlu0 %v474
      %v506 = vpop.xlane.xlu0 %505
      %507 = vadd.xlane.f32.xlu0 %v476
      %v508 = vpop.xlane.xlu0 %507
      %509 = vadd.xlane.f32.xlu0 %v478
      %v510 = vpop.xlane.xlu0 %509
      %v511 = vrcp.pop %v480
      %v512 = vrcp.pop %v482
      %v513 = vrcp.pop %v484
      %v514 = vrcp.pop %v486
      %v515 = vrcp.pop %v488
      %v516 = vrcp.pop %v490
      %v517 = vrcp.pop %v492
      %v518 = vrcp.pop %v494
      %v519 = vrcp.pop %v496
      %v520 = vrcp.pop %v498
      %v521 = vrcp.pop %v500
      %v522 = vrcp.pop %v502
      %v523 = vrcp.pop %v504
      %v524 = vrcp.pop %v506
      %v525 = vrcp.pop %v508
      %v526 = vrcp.pop %v510
      %v527 = vmul.f32 %v448, %v511
      %v528 = vmul.f32 %v450, %v512
      %v529 = vmul.f32 %v452, %v513
      %v530 = vmul.f32 %v454, %v514
      %v531 = vmul.f32 %v456, %v515
      %v532 = vmul.f32 %v458, %v516
      %v533 = vmul.f32 %v460, %v517
      %v534 = vmul.f32 %v462, %v518
      %v535 = vmul.f32 %v464, %v519
      %v536 = vmul.f32 %v466, %v520
      %v537 = vmul.f32 %v468, %v521
      %v538 = vmul.f32 %v470, %v522
      %v539 = vmul.f32 %v472, %v523
      %v540 = vmul.f32 %v474, %v524
      %v541 = vmul.f32 %v476, %v525
      %v542 = vmul.f32 %v478, %v526
      %v543 = vlaneseq
      %v544 = vshrl.u32 %v543, 7
      %v545 = vadd.s32 %v544, 8
      %v546 = vadd.s32 %v544, 16
      %v547 = vadd.s32 %v544, 24
      %v548 = vadd.s32 %v544, 32
      %v549 = vadd.s32 %v544, 40
      %v550 = vadd.s32 %v544, 48
      %v551 = vadd.s32 %v544, 56
      %v552 = vadd.s32 %v544, 64
      %v553 = vadd.s32 %v544, 72
      %v554 = vadd.s32 %v544, 80
      %v555 = vadd.s32 %v544, 88
      %v556 = vadd.s32 %v544, 96
      %v557 = vadd.s32 %v544, 104
      %v558 = vadd.s32 %v544, 112
      %v559 = vadd.s32 %v544, 120
      %v560 = vlaneseq
      %v561 = vand.u32 %v560, 127
      %vm562 = vcmp.eq.s32.totalorder %v544, %v561
      %vm563 = vcmp.eq.s32.totalorder %v545, %v561
      %vm564 = vcmp.eq.s32.totalorder %v546, %v561
      %vm565 = vcmp.eq.s32.totalorder %v547, %v561
      %vm566 = vcmp.eq.s32.totalorder %v548, %v561
      %vm567 = vcmp.eq.s32.totalorder %v549, %v561
      %vm568 = vcmp.eq.s32.totalorder %v550, %v561
      %vm569 = vcmp.eq.s32.totalorder %v551, %v561
      %vm570 = vcmp.eq.s32.totalorder %v552, %v561
      %vm571 = vcmp.eq.s32.totalorder %v553, %v561
      %vm572 = vcmp.eq.s32.totalorder %v554, %v561
      %vm573 = vcmp.eq.s32.totalorder %v555, %v561
      %vm574 = vcmp.eq.s32.totalorder %v556, %v561
      %vm575 = vcmp.eq.s32.totalorder %v557, %v561
      %vm576 = vcmp.eq.s32.totalorder %v558, %v561
      %vm577 = vcmp.eq.s32.totalorder %v559, %v561
      %v578 = vsel %vm562, 1, 0
      %v579 = vsel %vm563, 1, 0
      %v580 = vsel %vm564, 1, 0
      %v581 = vsel %vm565, 1, 0
      %v582 = vsel %vm566, 1, 0
      %v583 = vsel %vm567, 1, 0
      %v584 = vsel %vm568, 1, 0
      %v585 = vsel %vm569, 1, 0
      %v586 = vsel %vm570, 1, 0
      %v587 = vsel %vm571, 1, 0
      %v588 = vsel %vm572, 1, 0
      %v589 = vsel %vm573, 1, 0
      %v590 = vsel %vm574, 1, 0
      %v591 = vsel %vm575, 1, 0
      %v592 = vsel %vm576, 1, 0
      %v593 = vsel %vm577, 1, 0
      %v594 = vcvt.s32.f32 %v578
      %v595 = vcvt.s32.f32 %v579
      %v596 = vcvt.s32.f32 %v580
      %v597 = vcvt.s32.f32 %v581
      %v598 = vcvt.s32.f32 %v582
      %v599 = vcvt.s32.f32 %v583
      %v600 = vcvt.s32.f32 %v584
      %v601 = vcvt.s32.f32 %v585
      %v602 = vcvt.s32.f32 %v586
      %v603 = vcvt.s32.f32 %v587
      %v604 = vcvt.s32.f32 %v588
      %v605 = vcvt.s32.f32 %v589
      %v606 = vcvt.s32.f32 %v590
      %v607 = vcvt.s32.f32 %v591
      %v608 = vcvt.s32.f32 %v592
      %v609 = vcvt.s32.f32 %v593
      %v610 = vmul.f32 %v594, 1.5
      %v611 = vmul.f32 %v595, 1.5
      %v612 = vmul.f32 %v596, 1.5
      %v613 = vmul.f32 %v597, 1.5
      %v614 = vmul.f32 %v598, 1.5
      %v615 = vmul.f32 %v599, 1.5
      %v616 = vmul.f32 %v600, 1.5
      %v617 = vmul.f32 %v601, 1.5
      %v618 = vmul.f32 %v602, 1.5
      %v619 = vmul.f32 %v603, 1.5
      %v620 = vmul.f32 %v604, 1.5
      %v621 = vmul.f32 %v605, 1.5
      %v622 = vmul.f32 %v606, 1.5
      %v623 = vmul.f32 %v607, 1.5
      %v624 = vmul.f32 %v608, 1.5
      %v625 = vmul.f32 %v609, 1.5
      %v626 = vmul.f32 %v527, 0.5
      %v627 = vmul.f32 %v528, 0.5
      %v628 = vmul.f32 %v529, 0.5
      %v629 = vmul.f32 %v530, 0.5
      %v630 = vmul.f32 %v531, 0.5
      %v631 = vmul.f32 %v532, 0.5
      %v632 = vmul.f32 %v533, 0.5
      %v633 = vmul.f32 %v534, 0.5
      %v634 = vmul.f32 %v535, 0.5
      %v635 = vmul.f32 %v536, 0.5
      %v636 = vmul.f32 %v537, 0.5
      %v637 = vmul.f32 %v538, 0.5
      %v638 = vmul.f32 %v539, 0.5
      %v639 = vmul.f32 %v540, 0.5
      %v640 = vmul.f32 %v541, 0.5
      %v641 = vmul.f32 %v542, 0.5
      %v642 = vsub.f32 %v610, %v626
      %v643 = vsub.f32 %v611, %v627
      %v644 = vsub.f32 %v612, %v628
      %v645 = vsub.f32 %v613, %v629
      %v646 = vsub.f32 %v614, %v630
      %v647 = vsub.f32 %v615, %v631
      %v648 = vsub.f32 %v616, %v632
      %v649 = vsub.f32 %v617, %v633
      %v650 = vsub.f32 %v618, %v634
      %v651 = vsub.f32 %v619, %v635
      %v652 = vsub.f32 %v620, %v636
      %v653 = vsub.f32 %v621, %v637
      %v654 = vsub.f32 %v622, %v638
      %v655 = vsub.f32 %v623, %v639
      %v656 = vsub.f32 %v624, %v640
      %v657 = vsub.f32 %v625, %v641
      %v658 = vld [vmem:[#allocation3] sm:$0x1]
      %v659 = vmul.f32 %v658, 0.00390625
      %660 = vmatprep.subr.mxu0 0.0
      %661 = vmatpush1.msra.mxu0 %v642
      %662 = vmatprep.subr.mxu0 0.0
      %663 = vmatpush1.msra.mxu0 %v643
      %664 = vmatprep.subr.mxu0 0.0
      %665 = vmatpush1.msra.mxu0 %v644
      %666 = vmatprep.subr.mxu0 0.0
      %667 = vmatpush1.msra.mxu0 %v645
      %668 = vmatprep.subr.mxu0 0.0
      %669 = vmatpush1.msra.mxu0 %v646
      %670 = vmatprep.subr.mxu0 0.0
      %671 = vmatpush1.msra.mxu0 %v647
      %672 = vmatprep.subr.mxu0 0.0
      %673 = vmatpush1.msra.mxu0 %v648
      %674 = vmatprep.subr.mxu0 0.0
      %675 = vmatpush1.msra.mxu0 %v649
      %676 = vmatprep.subr.mxu0 0.0
      %677 = vmatpush1.msra.mxu0 %v650
      %678 = vmatprep.subr.mxu0 0.0
      %679 = vmatpush1.msra.mxu0 %v651
      %680 = vmatprep.subr.mxu0 0.0
      %681 = vmatpush1.msra.mxu0 %v652
      %682 = vmatprep.subr.mxu0 0.0
      %683 = vmatpush1.msra.mxu0 %v653
      %684 = vmatprep.subr.mxu0 0.0
      %685 = vmatpush1.msra.mxu0 %v654
      %686 = vmatprep.subr.mxu0 0.0
      %687 = vmatpush1.msra.mxu0 %v655
      %688 = vmatprep.subr.mxu0 0.0
      %689 = vmatpush1.msra.mxu0 %v656
      %690 = vmatprep.subr.mxu0 0.0
      %691 = vmatpush1.msra.mxu0 %v657
      %692 = vmatprep.subr.mxu0 0.0
      %693 = vmatpush1.msra.mxu0 0.0
      %694 = vmatprep.subr.mxu0 0.0
      %695 = vmatpush1.msra.mxu0 0.0
      %696 = vmatprep.subr.mxu0 0.0
      %697 = vmatpush1.msra.mxu0 0.0
      %698 = vmatprep.subr.mxu0 0.0
      %699 = vmatpush1.msra.mxu0 0.0
      %700 = vmatprep.subr.mxu0 0.0
      %701 = vmatpush1.msra.mxu0 0.0
      %702 = vmatprep.subr.mxu0 0.0
      %703 = vmatpush1.msra.mxu0 0.0
      %704 = vmatprep.subr.mxu0 0.0
      %705 = vmatpush1.msra.mxu0 0.0
      %706 = vmatprep.subr.mxu0 0.0
      %707 = vmatpush1.msra.mxu0 0.0
      %708 = vmatprep.subr.mxu0 0.0
      %709 = vmatpush1.msra.mxu0 0.0
      %710 = vmatprep.subr.mxu0 0.0
      %711 = vmatpush1.msra.mxu0 0.0
      %712 = vmatprep.subr.mxu0 0.0
      %713 = vmatpush1.msra.mxu0 0.0
      %714 = vmatprep.subr.mxu0 0.0
      %715 = vmatpush1.msra.mxu0 0.0
      %716 = vmatprep.subr.mxu0 0.0
      %717 = vmatpush1.msra.mxu0 0.0
      %718 = vmatprep.subr.mxu0 0.0
      %719 = vmatpush1.msra.mxu0 0.0
      %720 = vmatprep.subr.mxu0 0.0
      %721 = vmatpush1.msra.mxu0 0.0
      %722 = vmatprep.subr.mxu0 0.0
      %723 = vmatpush1.msra.mxu0 0.0
      %724 = vmatprep.mubr.f32.mxu0 0.0
      %725 = vmatmul.mubr.f32.gmra.mrb[0].mxu0 %v659
      %v726 = vpop.f32.mrb[0].mxu0
      %v727 = vadd.f32 0.0, %v726
      %v728 = vpop.f32.mrb[0].mxu0
      %729 = vdwg.mxu0
      %730 = vmatprep.subr.mxu0 0.0
      %731 = vmatpush1.msra.mxu0 %v642
      %732 = vmatprep.subr.mxu0 0.0
      %733 = vmatpush1.msra.mxu0 %v643
      %734 = vmatprep.subr.mxu0 0.0
      %735 = vmatpush1.msra.mxu0 %v644
      %736 = vmatprep.subr.mxu0 0.0
      %737 = vmatpush1.msra.mxu0 %v645
      %738 = vmatprep.subr.mxu0 0.0
      %739 = vmatpush1.msra.mxu0 %v646
      %740 = vmatprep.subr.mxu0 0.0
      %741 = vmatpush1.msra.mxu0 %v647
      %742 = vmatprep.subr.mxu0 0.0
      %743 = vmatpush1.msra.mxu0 %v648
      %744 = vmatprep.subr.mxu0 0.0
      %745 = vmatpush1.msra.mxu0 %v649
      %746 = vmatprep.subr.mxu0 0.0
      %747 = vmatpush1.msra.mxu0 %v650
      %748 = vmatprep.subr.mxu0 0.0
      %749 = vmatpush1.msra.mxu0 %v651
      %750 = vmatprep.subr.mxu0 0.0
      %751 = vmatpush1.msra.mxu0 %v652
      %752 = vmatprep.subr.mxu0 0.0
      %753 = vmatpush1.msra.mxu0 %v653
      %754 = vmatprep.subr.mxu0 0.0
      %755 = vmatpush1.msra.mxu0 %v654
      %756 = vmatprep.subr.mxu0 0.0
      %757 = vmatpush1.msra.mxu0 %v655
      %758 = vmatprep.subr.mxu0 0.0
      %759 = vmatpush1.msra.mxu0 %v656
      %760 = vmatprep.subr.mxu0 0.0
      %761 = vmatpush1.msra.mxu0 %v657
      %762 = vmatprep.subr.mxu0 0.0
      %763 = vmatpush1.msra.mxu0 0.0
      %764 = vmatprep.subr.mxu0 0.0
      %765 = vmatpush1.msra.mxu0 0.0
      %766 = vmatprep.subr.mxu0 0.0
      %767 = vmatpush1.msra.mxu0 0.0
      %768 = vmatprep.subr.mxu0 0.0
      %769 = vmatpush1.msra.mxu0 0.0
      %770 = vmatprep.subr.mxu0 0.0
      %771 = vmatpush1.msra.mxu0 0.0
      %772 = vmatprep.subr.mxu0 0.0
      %773 = vmatpush1.msra.mxu0 0.0
      %774 = vmatprep.subr.mxu0 0.0
      %775 = vmatpush1.msra.mxu0 0.0
      %776 = vmatprep.subr.mxu0 0.0
      %777 = vmatpush1.msra.mxu0 0.0
      %778 = vmatprep.subr.mxu0 0.0
      %779 = vmatpush1.msra.mxu0 0.0
      %780 = vmatprep.subr.mxu0 0.0
      %781 = vmatpush1.msra.mxu0 0.0
      %782 = vmatprep.subr.mxu0 0.0
      %783 = vmatpush1.msra.mxu0 0.0
      %784 = vmatprep.subr.mxu0 0.0
      %785 = vmatpush1.msra.mxu0 0.0
      %786 = vmatprep.subr.mxu0 0.0
      %787 = vmatpush1.msra.mxu0 0.0
      %788 = vmatprep.subr.mxu0 0.0
      %789 = vmatpush1.msra.mxu0 0.0
      %790 = vmatprep.subr.mxu0 0.0
      %791 = vmatpush1.msra.mxu0 0.0
      %792 = vmatprep.subr.mxu0 0.0
      %793 = vmatpush1.msra.mxu0 0.0
      %794 = vmatprep.mubr.f32.mxu0 0.0
      %795 = vmatmul.mubr.f32.gmra.mrb[0].mxu0 %v383
      %v796 = vpop.f32.mrb[0].mxu0
      %v797 = vadd.f32 0.0, %v796
      %v798 = vpop.f32.mrb[0].mxu0
      %799 = vmatprep.mubr.f32.mxu0 0.0
      %800 = vmatmul.mubr.f32.gmra.mrb[0].mxu0 %v384
      %v801 = vpop.f32.mrb[0].mxu0
      %v802 = vadd.f32 0.0, %v801
      %v803 = vpop.f32.mrb[0].mxu0
      %804 = vmatprep.mubr.f32.mxu0 0.0
      %805 = vmatmul.mubr.f32.gmra.mrb[0].mxu0 %v385
      %v806 = vpop.f32.mrb[0].mxu0
      %v807 = vadd.f32 0.0, %v806
      %v808 = vpop.f32.mrb[0].mxu0
      %809 = vmatprep.mubr.f32.mxu0 0.0
      %810 = vmatmul.mubr.f32.gmra.mrb[0].mxu0 %v386
      %v811 = vpop.f32.mrb[0].mxu0
      %v812 = vadd.f32 0.0, %v811
      %v813 = vpop.f32.mrb[0].mxu0
      %814 = vmatprep.mubr.f32.mxu0 0.0
      %815 = vmatmul.mubr.f32.gmra.mrb[0].mxu0 %v387
      %v816 = vpop.f32.mrb[0].mxu0
      %v817 = vadd.f32 0.0, %v816
      %v818 = vpop.f32.mrb[0].mxu0
      %819 = vmatprep.mubr.f32.mxu0 0.0
      %820 = vmatmul.mubr.f32.gmra.mrb[0].mxu0 %v388
      %v821 = vpop.f32.mrb[0].mxu0
      %v822 = vadd.f32 0.0, %v821
      %v823 = vpop.f32.mrb[0].mxu0
      %824 = vmatprep.mubr.f32.mxu0 0.0
      %825 = vmatmul.mubr.f32.gmra.mrb[0].mxu0 %v389
      %v826 = vpop.f32.mrb[0].mxu0
      %v827 = vadd.f32 0.0, %v826
      %v828 = vpop.f32.mrb[0].mxu0
      %829 = vmatprep.mubr.f32.mxu0 0.0
      %830 = vmatmul.mubr.f32.gmra.mrb[0].mxu0 %v390
      %v831 = vpop.f32.mrb[0].mxu0
      %v832 = vadd.f32 0.0, %v831
      %v833 = vpop.f32.mrb[0].mxu0
      %834 = vmatprep.mubr.f32.mxu0 0.0
      %835 = vmatmul.mubr.f32.gmra.mrb[0].mxu0 %v391
      %v836 = vpop.f32.mrb[0].mxu0
      %v837 = vadd.f32 0.0, %v836
      %v838 = vpop.f32.mrb[0].mxu0
      %839 = vmatprep.mubr.f32.mxu0 0.0
      %840 = vmatmul.mubr.f32.gmra.mrb[0].mxu0 %v392
      %v841 = vpop.f32.mrb[0].mxu0
      %v842 = vadd.f32 0.0, %v841
      %v843 = vpop.f32.mrb[0].mxu0
      %844 = vmatprep.mubr.f32.mxu0 0.0
      %845 = vmatmul.mubr.f32.gmra.mrb[0].mxu0 %v393
      %v846 = vpop.f32.mrb[0].mxu0
      %v847 = vadd.f32 0.0, %v846
      %v848 = vpop.f32.mrb[0].mxu0
      %849 = vmatprep.mubr.f32.mxu0 0.0
      %850 = vmatmul.mubr.f32.gmra.mrb[0].mxu0 %v394
      %v851 = vpop.f32.mrb[0].mxu0
      %v852 = vadd.f32 0.0, %v851
      %v853 = vpop.f32.mrb[0].mxu0
      %854 = vmatprep.mubr.f32.mxu0 0.0
      %855 = vmatmul.mubr.f32.gmra.mrb[0].mxu0 %v395
      %v856 = vpop.f32.mrb[0].mxu0
      %v857 = vadd.f32 0.0, %v856
      %v858 = vpop.f32.mrb[0].mxu0
      %859 = vmatprep.mubr.f32.mxu0 0.0
      %860 = vmatmul.mubr.f32.gmra.mrb[0].mxu0 %v396
      %v861 = vpop.f32.mrb[0].mxu0
      %v862 = vadd.f32 0.0, %v861
      %v863 = vpop.f32.mrb[0].mxu0
      %864 = vmatprep.mubr.f32.mxu0 0.0
      %865 = vmatmul.mubr.f32.gmra.mrb[0].mxu0 %v397
      %v866 = vpop.f32.mrb[0].mxu0
      %v867 = vadd.f32 0.0, %v866
      %v868 = vpop.f32.mrb[0].mxu0
      %869 = vmatprep.mubr.f32.mxu0 0.0
      %870 = vmatmul.mubr.f32.gmra.mrb[0].mxu0 %v398
      %v871 = vpop.f32.mrb[0].mxu0
      %v872 = vadd.f32 0.0, %v871
      %v873 = vpop.f32.mrb[0].mxu0
      %874 = vdwg.mxu0
      %v875 = vmul.f32 %v642, %v797
      %v876 = vmul.f32 %v643, %v802
      %v877 = vmul.f32 %v644, %v807
      %v878 = vmul.f32 %v645, %v812
      %v879 = vmul.f32 %v646, %v817
      %v880 = vmul.f32 %v647, %v822
      %v881 = vmul.f32 %v648, %v827
      %v882 = vmul.f32 %v649, %v832
      %v883 = vmul.f32 %v650, %v837
      %v884 = vmul.f32 %v651, %v842
      %v885 = vmul.f32 %v652, %v847
      %v886 = vmul.f32 %v653, %v852
      %v887 = vmul.f32 %v654, %v857
      %v888 = vmul.f32 %v655, %v862
      %v889 = vmul.f32 %v656, %v867
      %v890 = vmul.f32 %v657, %v872
      %v891 = vadd.f32 %v875, %v876
      %v892 = vadd.f32 %v891, %v877
      %v893 = vadd.f32 %v892, %v878
      %v894 = vadd.f32 %v893, %v879
      %v895 = vadd.f32 %v894, %v880
      %v896 = vadd.f32 %v895, %v881
      %v897 = vadd.f32 %v896, %v882
      %v898 = vadd.f32 %v897, %v883
      %v899 = vadd.f32 %v898, %v884
      %v900 = vadd.f32 %v899, %v885
      %v901 = vadd.f32 %v900, %v886
      %v902 = vadd.f32 %v901, %v887
      %v903 = vadd.f32 %v902, %v888
      %v904 = vadd.f32 %v903, %v889
      %v905 = vadd.f32 %v904, %v890
      %v906 = vrot.slane %v905, 4
      %v907 = vadd.f32 %v905, %v906
      %v908 = vrot.slane %v907, 2
      %v909 = vadd.f32 %v907, %v908
      %v910 = vrot.slane %v909, 1
      %v911 = vadd.f32 %v909, %v910
      %v912 = vmul.f32 %v911, 0.00390625
      %v913 = vmul.f32 %v727, %v727
      %v914 = vsub.f32 %v912, %v913
      %v915 = vmax.f32 %v914, 0.0
      %v916 = vadd.f32 %v915, 1e-05
      %v917 = vrsqrt.pop %v916
      %v918 = vld [vmem:[%s1] sm:$0x1]
      %v919 = vmul.f32 %v918, %v917
      %v920 = vld [vmem:[%s2] sm:$0x1]
      %v921 = vmul.f32 %v727, %v919
      %v922 = vsub.f32 %v920, %v921
      %923 = vst [vmem:[%s4] sm:$0x1] %v922
      %v925 = vlaneseq
      %v926 = vshrl.u32 %v925, 7
      %v927 = vsub.s32 0, %v926
      %v928 = vrot.slane %v919, %v927
      %v930 = vmul.f32 %v642, %v928
      %v931 = vmul.f32 %v643, %v928
      %v932 = vmul.f32 %v644, %v928
      %v933 = vmul.f32 %v645, %v928
      %v934 = vmul.f32 %v646, %v928
      %v935 = vmul.f32 %v647, %v928
      %v936 = vmul.f32 %v648, %v928
      %v937 = vmul.f32 %v649, %v928
      %v938 = vmul.f32 %v650, %v928
      %v939 = vmul.f32 %v651, %v928
      %v940 = vmul.f32 %v652, %v928
      %v941 = vmul.f32 %v653, %v928
      %v942 = vmul.f32 %v654, %v928
      %v943 = vmul.f32 %v655, %v928
      %v944 = vmul.f32 %v656, %v928
      %v945 = vmul.f32 %v657, %v928
      %946 = vst [vmem:[%s3] sm:$0xff] %v930
      %947 = vst [vmem:[%s3 + $0x8] sm:$0xff] %v931
      %948 = vst [vmem:[%s3 + $0x10] sm:$0xff] %v932
      %949 = vst [vmem:[%s3 + $0x18] sm:$0xff] %v933
      %950 = vst [vmem:[%s3 + $0x20] sm:$0xff] %v934
      %951 = vst [vmem:[%s3 + $0x28] sm:$0xff] %v935
      %952 = vst [vmem:[%s3 + $0x30] sm:$0xff] %v936
      %953 = vst [vmem:[%s3 + $0x38] sm:$0xff] %v937
      %954 = vst [vmem:[%s3 + $0x40] sm:$0xff] %v938
      %955 = vst [vmem:[%s3 + $0x48] sm:$0xff] %v939
      %956 = vst [vmem:[%s3 + $0x50] sm:$0xff] %v940
      %957 = vst [vmem:[%s3 + $0x58] sm:$0xff] %v941
      %958 = vst [vmem:[%s3 + $0x60] sm:$0xff] %v942
      %959 = vst [vmem:[%s3 + $0x68] sm:$0xff] %v943
      %960 = vst [vmem:[%s3 + $0x70] sm:$0xff] %v944
      %961 = vst [vmem:[%s3 + $0x78] sm:$0xff] %v945
    $region25: #{_lambda_.2} parent=1 // pred_fallthru
      _
    // Predicated region
    $region26: #{_lambda_.2} parent=1 // pred_check
      _
    $region27: #{_lambda_.2} parent=1 // pred_check_branch
      %963 = sbr.rel (0) target = $region29
    $region28: #{_lambda_.2} parent=1 // pred_region
      _
    $region29: #{_lambda_.2} parent=1 // pred_fallthru
      _
    // Predicated region
    $region30: #{_lambda_.2} parent=1 // pred_check
      _
    $region31: #{_lambda_.2} parent=1 // pred_check_branch
      %965 = sbr.rel (0) target = $region33
    $region32: #{_lambda_.2} parent=1 // pred_region
      _
    $region33: #{_lambda_.2} parent=1 // pred_fallthru
      _
    // Predicated region
    $region34: #{_lambda_.2} parent=1 // pred_check
      _
    $region35: #{_lambda_.2} parent=1 // pred_check_branch
      %967 = sbr.rel (0) target = $region37
    $region36: #{_lambda_.2} parent=1 // pred_region
      _
    $region37: #{_lambda_.2} parent=1 // pred_fallthru
      _
    // Predicated region
    $region38: #{_lambda_.2} parent=1 // pred_check
      _
    $region39: #{_lambda_.2} parent=1 // pred_check_branch
      %969 = sbr.rel (0) target = $region41
    $region40: #{_lambda_.2} parent=1 // pred_region
      _
    $region41: #{_lambda_.2} parent=1 // pred_fallthru
      _
    %970 = vsyncpa [#allocation5], 1

</llo_original>
